<compile_context>
chip_gen: v7x
topology: tpu7x:2x2x1
jax: 0.10.0
libtpu: 0.0.40
codegen_flags: <defaults>
</compile_context>

<pallas_src>
import jax
import jax.numpy as jnp
from jax.experimental import pallas as pl
from jax.experimental.pallas import tpu as pltpu


def _round_up(n, m):
    return ((n + m - 1) // m) * m


def _const_index_map(i):
    return (0, 0)


def _num_tensorcores():
    """Best-effort TensorCores-per-chip count (v5e/v6e: 1, v7x: 2)."""
    try:
        info = pltpu.get_tpu_info()
        for attr in ("num_cores", "core_count", "num_tensorcores", "tensorcore_count"):
            v = getattr(info, attr, None)
            if isinstance(v, int) and v > 0:
                return v
    except Exception:
        pass
    try:
        v = getattr(jax.devices()[0], "num_cores", None)
        if isinstance(v, int) and v > 0:
            return v
    except Exception:
        pass
    return 1


def _choose_tile_n(N, tile_n, n_cores, in_dim, out_dim, max_width, param_vmem):
    """Pick a lane-aligned batch tile; always a multiple of 128."""
    n128 = _round_up(N, 128)
    if tile_n is None:
        tile_n = 1024  # large-N default: amortizes fixed grid-step cost
    tile_n = max(128, (int(tile_n) // 128) * 128)  # snap to lane multiple
    if n_cores > 1:
        # Keep >= n_cores balanced grid steps so every TensorCore gets work.
        balanced = max(128, _round_up(-(-n128 // n_cores), 128))
        tile_n = min(tile_n, balanced)
    else:
        # Single TC: extra grid steps are pure per-step overhead; one tile.
        tile_n = min(tile_n, n128)

    # Keep activations + resident params inside a conservative scoped-VMEM budget.
    def _est(t):
        act = 4 * t * (2 * max(in_dim, 8) + 2 * max(out_dim, 8) + 4 * max_width)
        return param_vmem + act

    while tile_n > 128 and _est(tile_n) > (24 << 20):
        tile_n -= 128
    return tile_n


def _pack_params(weights, biases, matmul_dtype):
    """Pack per-layer params into few refs.

    Weights with equal in_features are row-concatenated (16-row aligned) into
    one array per group and pre-cast to `matmul_dtype` once.  All biases are
    concatenated (8-row aligned) into a single f32 [R, 1] array.
    Returns (packed_ws, b_all, layer_meta) with
      layer_meta[i] = (group_idx, w_row_off, b_row_off, out_f, in_f, is_last).
    """
    n_layers = len(weights)
    ROW_ALIGN = 16  # covers bf16 sublane packing (and f32's 8)

    # Group consecutive layers sharing in_features.
    groups = []
    for li, w in enumerate(weights):
        if groups and weights[groups[-1][0]].shape[1] == w.shape[1]:
            groups[-1].append(li)
        else:
            groups.append([li])

    packed_ws, w_meta = [], {}
    for gi, g in enumerate(groups):
        pads, off = [], 0
        for li in g:
            fo = weights[li].shape[0]
            w_meta[li] = (gi, off)
            fo_pad = _round_up(fo, ROW_ALIGN)
            pads.append(jnp.pad(weights[li], ((0, fo_pad - fo), (0, 0))))
            off += fo_pad
        packed_ws.append(jnp.concatenate(pads, axis=0).astype(matmul_dtype))

    b_pads, b_meta, boff = [], {}, 0
    for li, b in enumerate(biases):
        fo = b.shape[0]
        b_meta[li] = boff
        fo_pad = _round_up(fo, 8)
        b_pads.append(jnp.pad(b.reshape(-1, 1), ((0, fo_pad - fo), (0, 0))))
        boff += fo_pad
    b_all = jnp.concatenate(b_pads, axis=0).astype(jnp.float32)

    layer_meta = tuple(
        (w_meta[li][0], w_meta[li][1], b_meta[li],
         weights[li].shape[0], weights[li].shape[1], li == n_layers - 1)
        for li in range(n_layers)
    )
    return packed_ws, b_all, layer_meta


def _make_mlp_kernel(layer_meta, n_groups, matmul_dtype):
    """Kernel over one batch tile: the whole MLP (matmuls + tanh) in VMEM.

    refs = (x_ref, wg_0, ..., wg_{G-1}, b_all, out_ref)
      x_ref : [F_in, tile_n]     (batch on lanes, f32)
      wg_k  : packed [rows, F_in_of_group] weights, already in matmul_dtype
      b_all : [rows, 1] f32 packed biases
      out   : [F_last, tile_n]   lane-dense output slab
    """

    def kernel(*refs):
        x_ref = refs[0]
        wg_refs = refs[1:1 + n_groups]
        b_ref = refs[1 + n_groups]
        out_ref = refs[2 + n_groups]

        h = x_ref[...].astype(matmul_dtype)               # [F_in, tile_n]
        for gi, wro, bro, fo, _fi, is_last in layer_meta:
            w = wg_refs[gi][wro:wro + fo, :]              # [fo, fi], pre-cast
            b = b_ref[bro:bro + fo, :]                    # [fo, 1], f32
            z = jnp.dot(w, h, preferred_element_type=jnp.float32) + b
            if is_last:
                out_ref[...] = z.astype(out_ref.dtype)
            else:
                h = jnp.tanh(z).astype(matmul_dtype)      # tanh in f32 (EUP), cast for MXU

    return kernel


def dnn_forward(x, weights, biases, *, tile_n=None, matmul_dtype=jnp.bfloat16):
    """Forward pass of the DNN (Linear+Tanh stack) with one fused Pallas kernel.

    x:       [N, layers[0]] float32
    weights: list of [layers[i+1], layers[i]] float32 (PyTorch nn.Linear layout)
    biases:  list of [layers[i+1]] float32
    returns: [N, layers[-1]] float32
    """
    n_layers = len(weights)
    N, in_dim = x.shape
    out_dim = weights[-1].shape[0]
    assert in_dim == weights[0].shape[1]

    # Pack params once (weights pre-cast to the matmul dtype here, not in-kernel).
    packed_ws, b_all, layer_meta = _pack_params(weights, biases, matmul_dtype)
    itemsize = jnp.dtype(matmul_dtype).itemsize

    # TODO(synk): for truly wide NTK hidden layers (>~1-2K units) the resident
    # packed-weight blocks no longer fit v7x's 64 MiB VMEM; stream (tk, H)
    # weight tiles per layer with pltpu.emit_pipeline into an f32 [H, tile_n]
    # VMEM accumulator instead of keeping all weights resident.
    param_vmem = (
        2 * sum(int(w.size) * itemsize for w in packed_ws)   # conservative: 2 buffers
        + 2 * ((int(b_all.shape[0]) + 7) // 8) * 4096        # lane-padded bias vregs
    )
    max_width = max([in_dim] + [w.shape[0] for w in weights])

    n_cores = _num_tensorcores()
    tile_n = _choose_tile_n(N, tile_n, n_cores, in_dim, out_dim, max_width, param_vmem)

    grid_n = pl.cdiv(N, tile_n)
    n_pad = grid_n * tile_n

    # Lane-dense transposed input: batch on the 128-lane axis.  (For huge N one
    # could feed x untransposed and fold the transpose into the first-layer
    # dot_general; negligible at these sizes.)
    x_t = x.T
    if n_pad != N:
        x_t = jnp.pad(x_t, ((0, 0), (0, n_pad - N)))

    args = [x_t] + packed_ws + [b_all]

    # Advisory cost estimate for XLA's scheduler.
    flops = sum(2 * w.shape[0] * w.shape[1] * n_pad for w in weights)
    transcendentals = n_pad * sum(w.shape[0] for w in weights[:-1])
    bytes_accessed = int(
        int(x_t.size) * 4
        + sum(int(w.size) * itemsize for w in packed_ws)
        + int(b_all.size) * 4
        + out_dim * n_pad * 4
    )
    cost = pl.CostEstimate(
        flops=flops, transcendentals=transcendentals, bytes_accessed=bytes_accessed
    )

    # VMEM budget: resident params + double-buffered x/out tiles + a few live
    # activation slabs; 2x headroom, capped at 40 MiB (headroom on v7x's 64 MiB).
    act_vmem = 4 * tile_n * (2 * max(in_dim, 8) + 2 * max(out_dim, 8) + 4 * max_width)
    vmem_limit = int(min(max(2 * (param_vmem + act_vmem), 16 << 20), 40 << 20))

    kernel = _make_mlp_kernel(layer_meta, len(packed_ws), matmul_dtype)

    def _run(single_buffer_params):
        pkw = {"pipeline_mode": pl.Buffered(1)} if single_buffer_params else {}
        in_specs = [pl.BlockSpec((in_dim, tile_n), lambda i: (0, i))]
        for wg in packed_ws:
            in_specs.append(pl.BlockSpec(wg.shape, _const_index_map, **pkw))
        in_specs.append(pl.BlockSpec(b_all.shape, _const_index_map, **pkw))
        out_spec = pl.BlockSpec((out_dim, tile_n), lambda i: (0, i))
        return pl.pallas_call(
            kernel,
            out_shape=jax.ShapeDtypeStruct((out_dim, n_pad), x.dtype),
            grid=(grid_n,),
            in_specs=in_specs,
            out_specs=out_spec,
            compiler_params=pltpu.CompilerParams(
                dimension_semantics=("parallel",),
                vmem_limit_bytes=vmem_limit,
            ),
            cost_estimate=cost,
        )(*args)

    try:
        # Parameter block indices never change across grid steps -> single-buffer
        # them (halves resident weight VMEM; matters most on v7x's 64 MiB).
        out_padded = _run(True)
    except Exception:
        # Defensive fallback for JAX builds that reject pipeline_mode on the
        # top-level pallas_call pipeline: default (double) buffering.
        out_padded = _run(False)

    # Drop padded columns and return PyTorch-convention [N, out_dim].
    return out_padded[:, :N].T


def init_params(layers, key):
    """PyTorch nn.Linear-style init: U(-1/sqrt(fan_in), +1/sqrt(fan_in))."""
    weights, biases = [], []
    for i in range(len(layers) - 1):
        fan_in, fan_out = layers[i], layers[i + 1]
        key, kw, kb = jax.random.split(key, 3)
        bound = 1.0 / jnp.sqrt(float(fan_in))
        w = jax.random.uniform(kw, (fan_out, fan_in), jnp.float32, -bound, bound)
        b = jax.random.uniform(kb, (fan_out,), jnp.float32, -bound, bound)
        weights.append(w)
        biases.append(b)
    return weights, biases


def dnn_reference(x, weights, biases):
    """Pure-JAX reference mirroring torch: x @ W.T + b, tanh on hidden layers."""
    h = x
    n = len(weights)
    for i in range(n):
        h = h @ weights[i].T + biases[i]
        if i < n - 1:
            h = jnp.tanh(h)
    return h


if __name__ == "__main__":
    # Small PINN-like architecture consistent with the module's `layers` arg.
    layers = [2, 32, 32, 32, 1]
    N = 300  # collocation points (deliberately not a multiple of 128)

    key = jax.random.PRNGKey(0)
    key, kx = jax.random.split(key)
    x = jax.random.normal(kx, (N, layers[0]), jnp.float32)
    weights, biases = init_params(layers, key)

    ref = dnn_reference(x, weights, biases)

    # Exact-semantics path (f32 MXU operands) — tight tolerance.
    out_f32 = jax.block_until_ready(
        dnn_forward(x, weights, biases, matmul_dtype=jnp.float32)
    )
    assert out_f32.shape == (N, layers[-1])
    assert jnp.allclose(out_f32, ref, atol=1e-5, rtol=1e-5), "f32 mismatch vs reference"

    # Fast path (bf16 MXU operands, f32 accumulation) — the perf default.
    out_bf16 = jax.block_until_ready(dnn_forward(x, weights, biases))
    assert out_bf16.shape == (N, layers[-1])
    assert jnp.allclose(out_bf16, ref, atol=5e-2, rtol=5e-2), "bf16 mismatch vs reference"

    print("KERNEL_OK")
</pallas_src>

<mosaic_0001>
module attributes {stable_mosaic.version = 11 : i64} {
  func.func @kernel(%arg0: i32, %arg1: memref<2x384xf32, #tpu.memory_space<vmem>>, %arg2: memref<32x2xf32, #tpu.memory_space<vmem>>, %arg3: memref<80x32xf32, #tpu.memory_space<vmem>>, %arg4: memref<104x1xf32, #tpu.memory_space<vmem>>, %arg5: memref<1x384xf32, #tpu.memory_space<vmem>>) attributes {dimension_semantics = [#tpu.dimension_semantics<parallel>], iteration_bounds = array<i64: 1>, scalar_prefetch = 0 : i64, scratch_operands = 0 : i64, tpu.core_type = #tpu.core_type<tc>, window_params = [{transform_indices = @transform_0, window_bounds = array<i64: 2, 384>}, {pipeline_mode = #tpu.pipeline_mode<synchronous>, transform_indices = @transform_1, window_bounds = array<i64: 32, 2>}, {pipeline_mode = #tpu.pipeline_mode<synchronous>, transform_indices = @transform_2, window_bounds = array<i64: 80, 32>}, {pipeline_mode = #tpu.pipeline_mode<synchronous>, transform_indices = @transform_3, window_bounds = array<i64: 104, 1>}, {transform_indices = @transform_4, window_bounds = array<i64: 1, 384>}]} {
    %c0 = arith.constant 0 : index
    %c0_0 = arith.constant 0 : index
    %0 = vector.load %arg1[%c0, %c0_0] : memref<2x384xf32, #tpu.memory_space<vmem>>, vector<2x384xf32>
    %c0_1 = arith.constant 0 : index
    %c0_2 = arith.constant 0 : index
    %1 = vector.load %arg2[%c0_1, %c0_2] : memref<32x2xf32, #tpu.memory_space<vmem>>, vector<32x2xf32>
    %c0_3 = arith.constant 0 : index
    %c0_4 = arith.constant 0 : index
    %2 = vector.load %arg4[%c0_3, %c0_4] : memref<104x1xf32, #tpu.memory_space<vmem>>, vector<32x1xf32>
    %cst = arith.constant dense<0.000000e+00> : vector<32x384xf32>
    %3 = tpu.matmul %1, %0, %cst {dimension_numbers = #tpu.dot_dimension_numbers<[1], [0], [0], [1], [0, 0, 1, 1], [], []>} : vector<32x2xf32>, vector<2x384xf32>, vector<32x384xf32> -> vector<32x384xf32>
    %4 = vector.broadcast %2 : vector<32x1xf32> to vector<32x384xf32>
    %5 = arith.addf %3, %4 : vector<32x384xf32>
    %6 = math.tanh %5 : vector<32x384xf32>
    %c0_5 = arith.constant 0 : index
    %c0_6 = arith.constant 0 : index
    %7 = vector.load %arg3[%c0_5, %c0_6] : memref<80x32xf32, #tpu.memory_space<vmem>>, vector<32x32xf32>
    %c32 = arith.constant 32 : index
    %c0_7 = arith.constant 0 : index
    %8 = vector.load %arg4[%c32, %c0_7] : memref<104x1xf32, #tpu.memory_space<vmem>>, vector<32x1xf32>
    %cst_8 = arith.constant dense<0.000000e+00> : vector<32x384xf32>
    %9 = tpu.matmul %7, %6, %cst_8 {dimension_numbers = #tpu.dot_dimension_numbers<[1], [0], [0], [1], [0, 0, 1, 1], [], []>} : vector<32x32xf32>, vector<32x384xf32>, vector<32x384xf32> -> vector<32x384xf32>
    %10 = vector.broadcast %8 : vector<32x1xf32> to vector<32x384xf32>
    %11 = arith.addf %9, %10 : vector<32x384xf32>
    %12 = math.tanh %11 : vector<32x384xf32>
    %c32_9 = arith.constant 32 : index
    %c0_10 = arith.constant 0 : index
    %13 = vector.load %arg3[%c32_9, %c0_10] : memref<80x32xf32, #tpu.memory_space<vmem>>, vector<32x32xf32>
    %c64 = arith.constant 64 : index
    %c0_11 = arith.constant 0 : index
    %14 = vector.load %arg4[%c64, %c0_11] : memref<104x1xf32, #tpu.memory_space<vmem>>, vector<32x1xf32>
    %cst_12 = arith.constant dense<0.000000e+00> : vector<32x384xf32>
    %15 = tpu.matmul %13, %12, %cst_12 {dimension_numbers = #tpu.dot_dimension_numbers<[1], [0], [0], [1], [0, 0, 1, 1], [], []>} : vector<32x32xf32>, vector<32x384xf32>, vector<32x384xf32> -> vector<32x384xf32>
    %16 = vector.broadcast %14 : vector<32x1xf32> to vector<32x384xf32>
    %17 = arith.addf %15, %16 : vector<32x384xf32>
    %18 = math.tanh %17 : vector<32x384xf32>
    %c64_13 = arith.constant 64 : index
    %c0_14 = arith.constant 0 : index
    %19 = vector.load %arg3[%c64_13, %c0_14] : memref<80x32xf32, #tpu.memory_space<vmem>>, vector<1x32xf32>
    %c96 = arith.constant 96 : index
    %c0_15 = arith.constant 0 : index
    %20 = vector.load %arg4[%c96, %c0_15] : memref<104x1xf32, #tpu.memory_space<vmem>>, vector<1x1xf32>
    %cst_16 = arith.constant dense<0.000000e+00> : vector<1x384xf32>
    %21 = tpu.matmul %19, %18, %cst_16 {dimension_numbers = #tpu.dot_dimension_numbers<[1], [0], [0], [1], [0, 0, 1, 1], [], []>} : vector<1x32xf32>, vector<32x384xf32>, vector<1x384xf32> -> vector<1x384xf32>
    %22 = vector.broadcast %20 : vector<1x1xf32> to vector<1x384xf32>
    %23 = arith.addf %21, %22 : vector<1x384xf32>
    %c0_17 = arith.constant 0 : index
    %c0_18 = arith.constant 0 : index
    %24 = vector.load %arg5[%c0_17, %c0_18] : memref<1x384xf32, #tpu.memory_space<vmem>>, vector<1x384xf32>
    tpu.vector_store %arg5[%c0_17, %c0_18], %23 {strides = array<i32>} : memref<1x384xf32, #tpu.memory_space<vmem>>, vector<1x384xf32>,
    return
  }
  func.func @transform_0(%arg0: i32) -> (i32, i32) {
    %c0_i32 = arith.constant 0 : i32
    %c0_i32_0 = arith.constant 0 : i32
    return %c0_i32, %arg0 : i32, i32
  }
  func.func @transform_1(%arg0: i32) -> (i32, i32) {
    %c0_i32 = arith.constant 0 : i32
    %c0_i32_0 = arith.constant 0 : i32
    %c0_i32_1 = arith.constant 0 : i32
    return %c0_i32, %c0_i32_0 : i32, i32
  }
  func.func @transform_2(%arg0: i32) -> (i32, i32) {
    %c0_i32 = arith.constant 0 : i32
    %c0_i32_0 = arith.constant 0 : i32
    %c0_i32_1 = arith.constant 0 : i32
    return %c0_i32, %c0_i32_0 : i32, i32
  }
  func.func @transform_3(%arg0: i32) -> (i32, i32) {
    %c0_i32 = arith.constant 0 : i32
    %c0_i32_0 = arith.constant 0 : i32
    %c0_i32_1 = arith.constant 0 : i32
    return %c0_i32, %c0_i32_0 : i32, i32
  }
  func.func @transform_4(%arg0: i32) -> (i32, i32) {
    %c0_i32 = arith.constant 0 : i32
    %c0_i32_0 = arith.constant 0 : i32
    return %c0_i32, %arg0 : i32, i32
  }
}

module attributes {stable_mosaic.version = 11 : i64} {
  func.func @kernel(%arg0: i32, %arg1: memref<2x384xf32, #tpu.memory_space<vmem>>, %arg2: memref<32x2xf32, #tpu.memory_space<vmem>>, %arg3: memref<80x32xf32, #tpu.memory_space<vmem>>, %arg4: memref<104x1xf32, #tpu.memory_space<vmem>>, %arg5: memref<1x384xf32, #tpu.memory_space<vmem>>) attributes {dimension_semantics = [#tpu.dimension_semantics<parallel>], iteration_bounds = array<i64: 1>, scalar_prefetch = 0 : i64, scratch_operands = 0 : i64, tpu.core_type = #tpu.core_type<tc>, window_params = [{transform_indices = @transform_0, window_bounds = array<i64: 2, 384>}, {pipeline_mode = #tpu.pipeline_mode<synchronous>, transform_indices = @transform_1, window_bounds = array<i64: 32, 2>}, {pipeline_mode = #tpu.pipeline_mode<synchronous>, transform_indices = @transform_2, window_bounds = array<i64: 80, 32>}, {pipeline_mode = #tpu.pipeline_mode<synchronous>, transform_indices = @transform_3, window_bounds = array<i64: 104, 1>}, {transform_indices = @transform_4, window_bounds = array<i64: 1, 384>}]} {
    %c0 = arith.constant 0 : index
    %c0_0 = arith.constant 0 : index
    %0 = vector.load %arg1[%c0, %c0_0] : memref<2x384xf32, #tpu.memory_space<vmem>>, vector<2x384xf32>
    %c0_1 = arith.constant 0 : index
    %c0_2 = arith.constant 0 : index
    %1 = vector.load %arg2[%c0_1, %c0_2] : memref<32x2xf32, #tpu.memory_space<vmem>>, vector<32x2xf32>
    %c0_3 = arith.constant 0 : index
    %c0_4 = arith.constant 0 : index
    %2 = vector.load %arg4[%c0_3, %c0_4] : memref<104x1xf32, #tpu.memory_space<vmem>>, vector<32x1xf32>
    %cst = arith.constant dense<0.000000e+00> : vector<32x384xf32>
    %3 = tpu.matmul %1, %0, %cst {dimension_numbers = #tpu.dot_dimension_numbers<[1], [0], [0], [1], [0, 0, 1, 1], [], []>} : vector<32x2xf32>, vector<2x384xf32>, vector<32x384xf32> -> vector<32x384xf32>
    %4 = vector.broadcast %2 : vector<32x1xf32> to vector<32x384xf32>
    %5 = arith.addf %3, %4 : vector<32x384xf32>
    %6 = math.tanh %5 : vector<32x384xf32>
    %c0_5 = arith.constant 0 : index
    %c0_6 = arith.constant 0 : index
    %7 = vector.load %arg3[%c0_5, %c0_6] : memref<80x32xf32, #tpu.memory_space<vmem>>, vector<32x32xf32>
    %c32 = arith.constant 32 : index
    %c0_7 = arith.constant 0 : index
    %8 = vector.load %arg4[%c32, %c0_7] : memref<104x1xf32, #tpu.memory_space<vmem>>, vector<32x1xf32>
    %cst_8 = arith.constant dense<0.000000e+00> : vector<32x384xf32>
    %9 = tpu.matmul %7, %6, %cst_8 {dimension_numbers = #tpu.dot_dimension_numbers<[1], [0], [0], [1], [0, 0, 1, 1], [], []>} : vector<32x32xf32>, vector<32x384xf32>, vector<32x384xf32> -> vector<32x384xf32>
    %10 = vector.broadcast %8 : vector<32x1xf32> to vector<32x384xf32>
    %11 = arith.addf %9, %10 : vector<32x384xf32>
    %12 = math.tanh %11 : vector<32x384xf32>
    %c32_9 = arith.constant 32 : index
    %c0_10 = arith.constant 0 : index
    %13 = vector.load %arg3[%c32_9, %c0_10] : memref<80x32xf32, #tpu.memory_space<vmem>>, vector<32x32xf32>
    %c64 = arith.constant 64 : index
    %c0_11 = arith.constant 0 : index
    %14 = vector.load %arg4[%c64, %c0_11] : memref<104x1xf32, #tpu.memory_space<vmem>>, vector<32x1xf32>
    %cst_12 = arith.constant dense<0.000000e+00> : vector<32x384xf32>
    %15 = tpu.matmul %13, %12, %cst_12 {dimension_numbers = #tpu.dot_dimension_numbers<[1], [0], [0], [1], [0, 0, 1, 1], [], []>} : vector<32x32xf32>, vector<32x384xf32>, vector<32x384xf32> -> vector<32x384xf32>
    %16 = vector.broadcast %14 : vector<32x1xf32> to vector<32x384xf32>
    %17 = arith.addf %15, %16 : vector<32x384xf32>
    %18 = math.tanh %17 : vector<32x384xf32>
    %c64_13 = arith.constant 64 : index
    %c0_14 = arith.constant 0 : index
    %19 = vector.load %arg3[%c64_13, %c0_14] : memref<80x32xf32, #tpu.memory_space<vmem>>, vector<1x32xf32>
    %c96 = arith.constant 96 : index
    %c0_15 = arith.constant 0 : index
    %20 = vector.load %arg4[%c96, %c0_15] : memref<104x1xf32, #tpu.memory_space<vmem>>, vector<1x1xf32>
    %cst_16 = arith.constant dense<0.000000e+00> : vector<1x384xf32>
    %21 = tpu.matmul %19, %18, %cst_16 {dimension_numbers = #tpu.dot_dimension_numbers<[1], [0], [0], [1], [0, 0, 1, 1], [], []>} : vector<1x32xf32>, vector<32x384xf32>, vector<1x384xf32> -> vector<1x384xf32>
    %22 = vector.broadcast %20 : vector<1x1xf32> to vector<1x384xf32>
    %23 = arith.addf %21, %22 : vector<1x384xf32>
    %c0_17 = arith.constant 0 : index
    %c0_18 = arith.constant 0 : index
    %24 = vector.load %arg5[%c0_17, %c0_18] : memref<1x384xf32, #tpu.memory_space<vmem>>, vector<1x384xf32>
    tpu.vector_store %arg5[%c0_17, %c0_18], %23 {strides = array<i32>} : memref<1x384xf32, #tpu.memory_space<vmem>>, vector<1x384xf32>,
    return
  }
  func.func @transform_0(%arg0: i32) -> (i32, i32) {
    %c0_i32 = arith.constant 0 : i32
    %c0_i32_0 = arith.constant 0 : i32
    return %c0_i32, %arg0 : i32, i32
  }
  func.func @transform_1(%arg0: i32) -> (i32, i32) {
    %c0_i32 = arith.constant 0 : i32
    %c0_i32_0 = arith.constant 0 : i32
    %c0_i32_1 = arith.constant 0 : i32
    return %c0_i32, %c0_i32_0 : i32, i32
  }
  func.func @transform_2(%arg0: i32) -> (i32, i32) {
    %c0_i32 = arith.constant 0 : i32
    %c0_i32_0 = arith.constant 0 : i32
    %c0_i32_1 = arith.constant 0 : i32
    return %c0_i32, %c0_i32_0 : i32, i32
  }
  func.func @transform_3(%arg0: i32) -> (i32, i32) {
    %c0_i32 = arith.constant 0 : i32
    %c0_i32_0 = arith.constant 0 : i32
    %c0_i32_1 = arith.constant 0 : i32
    return %c0_i32, %c0_i32_0 : i32, i32
  }
  func.func @transform_4(%arg0: i32) -> (i32, i32) {
    %c0_i32 = arith.constant 0 : i32
    %c0_i32_0 = arith.constant 0 : i32
    return %c0_i32, %arg0 : i32, i32
  }
}

</mosaic_0001>

<llo_original>
// kernel: tpu_custom_call.1
$region0: #{tpu_custom_call.1}
  #allocation0 [shape = 'u32[]', space=smem, size = 0x4, offset = 0x4, fixed_abs, tag = 'smem constant byte address 0x4 - core index']
  #allocation1 [shape = 'u32[144,128]{1,0:T(1,128)}', space=vmem, size = 0x12000, scoped, tag = 'internal scratch']
  %s0 = inlined_call_operand.vmem [shape: f32[2,384], index: 0, kind: input, shape index: {}]
  %s1 = inlined_call_operand.vmem [shape: f32[32,2], index: 1, kind: input, shape index: {}]
  %s2 = inlined_call_operand.vmem [shape: f32[80,32], index: 2, kind: input, shape index: {}]
  %s3 = inlined_call_operand.vmem [shape: f32[104,1], index: 3, kind: input, shape index: {}]
  %s4 = inlined_call_operand.hbm [shape: f32[1,384], index: 4, kind: output, shape index: {}]
  %s5 = sld [smem:[#allocation0]]
  $region26: #{tpu_custom_call.1} parent=0
    _
  %s7 = ssub.s32 1, %s5
  %s8 = scalar_select 0, %s7, %s5
  $region1: #{tpu_custom_call.1} parent=0
    #allocation2 [shape = 'u8[1536]{0}', space=vmem, size = 0x800, scoped, tag = 'output window, operand 0, single buffered']
    #allocation3 [shape = 's32[1]{0}', space=sflag, size = 0x4, scoped, tag = 'scoped memory for tpu_custom_call.1']
    %9 = vsyncpa [#allocation3], 0
    // Predicated region
    $region2: #{tpu_custom_call.1} parent=1 // pred_check
      _
    $region3: #{tpu_custom_call.1} parent=1 // pred_check_branch
      %11 = sbr.rel (0) target = $region5
    $region4: #{tpu_custom_call.1} parent=1 // pred_region
      _
    $region5: #{tpu_custom_call.1} parent=1 // pred_fallthru
      _
    // Predicated region
    $region6: #{tpu_custom_call.1} parent=1 // pred_check
      _
    $region7: #{tpu_custom_call.1} parent=1 // pred_check_branch
      %13 = sbr.rel (0) target = $region9
    $region8: #{tpu_custom_call.1} parent=1 // pred_region
      _
    $region9: #{tpu_custom_call.1} parent=1 // pred_fallthru
      _
    // Predicated region
    $region10: #{tpu_custom_call.1} parent=1 // pred_check
      _
    $region11: #{tpu_custom_call.1} parent=1 // pred_check_branch
      %15 = sbr.rel (0) target = $region13
    $region12: #{tpu_custom_call.1} parent=1 // pred_region
      _
    $region13: #{tpu_custom_call.1} parent=1 // pred_fallthru
      _
    // Predicated region
    $region14: #{tpu_custom_call.1} parent=1 // pred_check
      _
    $region15: #{tpu_custom_call.1} parent=1 // pred_check_branch
      %17 = sbr.rel (0) target = $region17
    $region16: #{tpu_custom_call.1} parent=1 // pred_region
      _
    $region17: #{tpu_custom_call.1} parent=1 // pred_fallthru
      _
    %v18 = vld [vmem:[%s0] sm:$0x3f]
    %v19 = vld [vmem:[%s1] sm:$0xff]
    %v20 = vld [vmem:[%s1 + $0x8] sm:$0xff]
    %v21 = vld [vmem:[%s1 + $0x10] sm:$0xff]
    %v22 = vld [vmem:[%s1 + $0x18] sm:$0xff]
    %v23 = vld [vmem:[%s3] sm:$0xff]
    %v24 = vld [vmem:[%s3 + $0x8] sm:$0xff]
    %v25 = vld [vmem:[%s3 + $0x10] sm:$0xff]
    %v26 = vld [vmem:[%s3 + $0x18] sm:$0xff]
    %28 = vset.pattern.permute.xlu0 0
    %29 = vperm.xlu0 %28, %v23
    %v30 = vpop.permute.xlu0 %29
    %33 = vset.pattern.permute.xlu0 0
    %34 = vperm.xlu0 %33, %v24
    %v35 = vpop.permute.xlu0 %34
    %38 = vset.pattern.permute.xlu0 0
    %39 = vperm.xlu0 %38, %v25
    %v40 = vpop.permute.xlu0 %39
    %43 = vset.pattern.permute.xlu0 0
    %44 = vperm.xlu0 %43, %v26
    %v45 = vpop.permute.xlu0 %44
    %v48 = vcombine.high %v18, %v18
    %v50 = vunpack.c.l.s4 1983009808
    %v51 = vunpack.c.0.s8 %v50
    %v52 = vlaneseq
    %v53 = vshrl.u32 %v52, 7
    %v54 = vsub.s32 %v51, %v53
    %v55 = vrot.slane %v18, %v54
    %v57 = vunpack.c.l.s4 1983009808
    %v58 = vunpack.c.0.s8 %v57
    %v59 = vlaneseq
    %v60 = vshrl.u32 %v59, 7
    %v61 = vsub.s32 %v58, %v60
    %v62 = vrot.slane %v48, %v61
    %v63 = vcombine.high %v55, %v55
    %vm64 = vcmask 15360
    %v66 = vsel %vm64, %v19, 0
    %v69 = vsel %vm64, %v20, 0
    %v72 = vsel %vm64, %v21, 0
    %v75 = vsel %vm64, %v22, 0
    %vm77 = vcmask 1041408
    %v78 = vsel %vm77, %v55, 0
    %v80 = vsel %vm77, %v63, 0
    %v82 = vsel %vm77, %v62, 0
    %84 = vmatprep.subr.mxu0 %v80
    %85 = vmatpush1.msra.mxu0 %v78
    %86 = vmatprep.subr.mxu0 0.0
    %87 = vmatpush1.msra.mxu0 0.0
    %88 = vmatprep.subr.mxu0 0.0
    %89 = vmatpush1.msra.mxu0 0.0
    %90 = vmatprep.subr.mxu0 0.0
    %91 = vmatpush1.msra.mxu0 0.0
    %92 = vmatprep.subr.mxu0 0.0
    %93 = vmatpush1.msra.mxu0 0.0
    %94 = vmatprep.subr.mxu0 0.0
    %95 = vmatpush1.msra.mxu0 0.0
    %96 = vmatprep.subr.mxu0 0.0
    %97 = vmatpush1.msra.mxu0 0.0
    %98 = vmatprep.subr.mxu0 0.0
    %99 = vmatpush1.msra.mxu0 0.0
    %100 = vmatprep.subr.mxu0 0.0
    %101 = vmatpush1.msra.mxu0 0.0
    %102 = vmatprep.subr.mxu0 0.0
    %103 = vmatpush1.msra.mxu0 0.0
    %104 = vmatprep.subr.mxu0 0.0
    %105 = vmatpush1.msra.mxu0 0.0
    %106 = vmatprep.subr.mxu0 0.0
    %107 = vmatpush1.msra.mxu0 0.0
    %108 = vmatprep.subr.mxu0 0.0
    %109 = vmatpush1.msra.mxu0 0.0
    %110 = vmatprep.subr.mxu0 0.0
    %111 = vmatpush1.msra.mxu0 0.0
    %112 = vmatprep.subr.mxu0 0.0
    %113 = vmatpush1.msra.mxu0 0.0
    %114 = vmatprep.subr.mxu0 0.0
    %115 = vmatpush1.msra.mxu0 0.0
    %116 = vmatprep.subr.mxu0 0.0
    %117 = vmatpush1.msra.mxu0 0.0
    %118 = vmatprep.subr.mxu0 0.0
    %119 = vmatpush1.msra.mxu0 0.0
    %120 = vmatprep.subr.mxu0 0.0
    %121 = vmatpush1.msra.mxu0 0.0
    %122 = vmatprep.subr.mxu0 0.0
    %123 = vmatpush1.msra.mxu0 0.0
    %124 = vmatprep.subr.mxu0 0.0
    %125 = vmatpush1.msra.mxu0 0.0
    %126 = vmatprep.subr.mxu0 0.0
    %127 = vmatpush1.msra.mxu0 0.0
    %128 = vmatprep.subr.mxu0 0.0
    %129 = vmatpush1.msra.mxu0 0.0
    %130 = vmatprep.subr.mxu0 0.0
    %131 = vmatpush1.msra.mxu0 0.0
    %132 = vmatprep.subr.mxu0 0.0
    %133 = vmatpush1.msra.mxu0 0.0
    %134 = vmatprep.subr.mxu0 0.0
    %135 = vmatpush1.msra.mxu0 0.0
    %136 = vmatprep.subr.mxu0 0.0
    %137 = vmatpush1.msra.mxu0 0.0
    %138 = vmatprep.subr.mxu0 0.0
    %139 = vmatpush1.msra.mxu0 0.0
    %140 = vmatprep.subr.mxu0 0.0
    %141 = vmatpush1.msra.mxu0 0.0
    %142 = vmatprep.subr.mxu0 0.0
    %143 = vmatpush1.msra.mxu0 0.0
    %144 = vmatprep.subr.mxu0 0.0
    %145 = vmatpush1.msra.mxu0 0.0
    %146 = vmatprep.subr.mxu0 0.0
    %147 = vmatpush1.msra.mxu0 0.0
    %148 = vmatprep.mubr.f32.mxu0 0.0
    %149 = vmatmul.mubr.f32.gmra.mrb[0].mxu0 %v66
    %v150 = vpop.f32.mrb[0].mxu0
    %v151 = vadd.f32 %v30, %v150
    %v152 = vpop.f32.mrb[0].mxu0
    %v153 = vadd.f32 %v30, %v152
    %154 = vmatprep.mubr.f32.mxu0 0.0
    %155 = vmatmul.mubr.f32.gmra.mrb[0].mxu0 %v69
    %v156 = vpop.f32.mrb[0].mxu0
    %v157 = vadd.f32 %v35, %v156
    %v158 = vpop.f32.mrb[0].mxu0
    %v159 = vadd.f32 %v35, %v158
    %160 = vmatprep.mubr.f32.mxu0 0.0
    %161 = vmatmul.mubr.f32.gmra.mrb[0].mxu0 %v72
    %v162 = vpop.f32.mrb[0].mxu0
    %v163 = vadd.f32 %v40, %v162
    %v164 = vpop.f32.mrb[0].mxu0
    %v165 = vadd.f32 %v40, %v164
    %166 = vmatprep.mubr.f32.mxu0 0.0
    %167 = vmatmul.mubr.f32.gmra.mrb[0].mxu0 %v75
    %v168 = vpop.f32.mrb[0].mxu0
    %v169 = vadd.f32 %v45, %v168
    %v170 = vpop.f32.mrb[0].mxu0
    %v171 = vadd.f32 %v45, %v170
    %172 = vdwg.mxu0
    %173 = vmatprep.subr.mxu0 0.0
    %174 = vmatpush1.msra.mxu0 %v82
    %175 = vmatprep.subr.mxu0 0.0
    %176 = vmatpush1.msra.mxu0 0.0
    %177 = vmatprep.subr.mxu0 0.0
    %178 = vmatpush1.msra.mxu0 0.0
    %179 = vmatprep.subr.mxu0 0.0
    %180 = vmatpush1.msra.mxu0 0.0
    %181 = vmatprep.subr.mxu0 0.0
    %182 = vmatpush1.msra.mxu0 0.0
    %183 = vmatprep.subr.mxu0 0.0
    %184 = vmatpush1.msra.mxu0 0.0
    %185 = vmatprep.subr.mxu0 0.0
    %186 = vmatpush1.msra.mxu0 0.0
    %187 = vmatprep.subr.mxu0 0.0
    %188 = vmatpush1.msra.mxu0 0.0
    %189 = vmatprep.subr.mxu0 0.0
    %190 = vmatpush1.msra.mxu0 0.0
    %191 = vmatprep.subr.mxu0 0.0
    %192 = vmatpush1.msra.mxu0 0.0
    %193 = vmatprep.subr.mxu0 0.0
    %194 = vmatpush1.msra.mxu0 0.0
    %195 = vmatprep.subr.mxu0 0.0
    %196 = vmatpush1.msra.mxu0 0.0
    %197 = vmatprep.subr.mxu0 0.0
    %198 = vmatpush1.msra.mxu0 0.0
    %199 = vmatprep.subr.mxu0 0.0
    %200 = vmatpush1.msra.mxu0 0.0
    %201 = vmatprep.subr.mxu0 0.0
    %202 = vmatpush1.msra.mxu0 0.0
    %203 = vmatprep.subr.mxu0 0.0
    %204 = vmatpush1.msra.mxu0 0.0
    %205 = vmatprep.subr.mxu0 0.0
    %206 = vmatpush1.msra.mxu0 0.0
    %207 = vmatprep.subr.mxu0 0.0
    %208 = vmatpush1.msra.mxu0 0.0
    %209 = vmatprep.subr.mxu0 0.0
    %210 = vmatpush1.msra.mxu0 0.0
    %211 = vmatprep.subr.mxu0 0.0
    %212 = vmatpush1.msra.mxu0 0.0
    %213 = vmatprep.subr.mxu0 0.0
    %214 = vmatpush1.msra.mxu0 0.0
    %215 = vmatprep.subr.mxu0 0.0
    %216 = vmatpush1.msra.mxu0 0.0
    %217 = vmatprep.subr.mxu0 0.0
    %218 = vmatpush1.msra.mxu0 0.0
    %219 = vmatprep.subr.mxu0 0.0
    %220 = vmatpush1.msra.mxu0 0.0
    %221 = vmatprep.subr.mxu0 0.0
    %222 = vmatpush1.msra.mxu0 0.0
    %223 = vmatprep.subr.mxu0 0.0
    %224 = vmatpush1.msra.mxu0 0.0
    %225 = vmatprep.subr.mxu0 0.0
    %226 = vmatpush1.msra.mxu0 0.0
    %227 = vmatprep.subr.mxu0 0.0
    %228 = vmatpush1.msra.mxu0 0.0
    %229 = vmatprep.subr.mxu0 0.0
    %230 = vmatpush1.msra.mxu0 0.0
    %231 = vmatprep.subr.mxu0 0.0
    %232 = vmatpush1.msra.mxu0 0.0
    %233 = vmatprep.subr.mxu0 0.0
    %234 = vmatpush1.msra.mxu0 0.0
    %235 = vmatprep.subr.mxu0 0.0
    %236 = vmatpush1.msra.mxu0 0.0
    %237 = vmatprep.mubr.f32.mxu0 0.0
    %238 = vmatmul.mubr.f32.gmra.mrb[0].mxu0 %v66
    %v239 = vpop.f32.mrb[0].mxu0
    %v240 = vadd.f32 %v30, %v239
    %v241 = vpop.f32.mrb[0].mxu0
    %242 = vmatprep.mubr.f32.mxu0 0.0
    %243 = vmatmul.mubr.f32.gmra.mrb[0].mxu0 %v69
    %v244 = vpop.f32.mrb[0].mxu0
    %v245 = vadd.f32 %v35, %v244
    %v246 = vpop.f32.mrb[0].mxu0
    %247 = vmatprep.mubr.f32.mxu0 0.0
    %248 = vmatmul.mubr.f32.gmra.mrb[0].mxu0 %v72
    %v249 = vpop.f32.mrb[0].mxu0
    %v250 = vadd.f32 %v40, %v249
    %v251 = vpop.f32.mrb[0].mxu0
    %252 = vmatprep.mubr.f32.mxu0 0.0
    %253 = vmatmul.mubr.f32.gmra.mrb[0].mxu0 %v75
    %v254 = vpop.f32.mrb[0].mxu0
    %v255 = vadd.f32 %v45, %v254
    %v256 = vpop.f32.mrb[0].mxu0
    %257 = vdwg.mxu0
    %v258 = vtanh.pop %v151
    %v259 = vtanh.pop %v153
    %v260 = vtanh.pop %v240
    %v261 = vtanh.pop %v157
    %v262 = vtanh.pop %v159
    %v263 = vtanh.pop %v245
    %v264 = vtanh.pop %v163
    %v265 = vtanh.pop %v165
    %v266 = vtanh.pop %v250
    %v267 = vtanh.pop %v169
    %v268 = vtanh.pop %v171
    %v269 = vtanh.pop %v255
    %v270 = vld [vmem:[%s2] sm:$0xff]
    %v271 = vld [vmem:[%s2 + $0x8] sm:$0xff]
    %v272 = vld [vmem:[%s2 + $0x10] sm:$0xff]
    %v273 = vld [vmem:[%s2 + $0x18] sm:$0xff]
    %v274 = vld [vmem:[%s3 + $0x20] sm:$0xff]
    %v275 = vld [vmem:[%s3 + $0x28] sm:$0xff]
    %v276 = vld [vmem:[%s3 + $0x30] sm:$0xff]
    %v277 = vld [vmem:[%s3 + $0x38] sm:$0xff]
    %279 = vset.pattern.permute.xlu0 0
    %280 = vperm.xlu0 %279, %v274
    %v281 = vpop.permute.xlu0 %280
    %284 = vset.pattern.permute.xlu0 0
    %285 = vperm.xlu0 %284, %v275
    %v286 = vpop.permute.xlu0 %285
    %289 = vset.pattern.permute.xlu0 0
    %290 = vperm.xlu0 %289, %v276
    %v291 = vpop.permute.xlu0 %290
    %294 = vset.pattern.permute.xlu0 0
    %295 = vperm.xlu0 %294, %v277
    %v296 = vpop.permute.xlu0 %295
    %vm298 = vcmask 261120
    %v300 = vsel %vm298, %v270, 0
    %v303 = vsel %vm298, %v271, 0
    %v306 = vsel %vm298, %v272, 0
    %v309 = vsel %vm298, %v273, 0
    %311 = vmatprep.subr.mxu0 %v259
    %312 = vmatpush1.msra.mxu0 %v258
    %313 = vmatprep.subr.mxu0 %v262
    %314 = vmatpush1.msra.mxu0 %v261
    %315 = vmatprep.subr.mxu0 %v265
    %316 = vmatpush1.msra.mxu0 %v264
    %317 = vmatprep.subr.mxu0 %v268
    %318 = vmatpush1.msra.mxu0 %v267
    %319 = vmatprep.subr.mxu0 0.0
    %320 = vmatpush1.msra.mxu0 0.0
    %321 = vmatprep.subr.mxu0 0.0
    %322 = vmatpush1.msra.mxu0 0.0
    %323 = vmatprep.subr.mxu0 0.0
    %324 = vmatpush1.msra.mxu0 0.0
    %325 = vmatprep.subr.mxu0 0.0
    %326 = vmatpush1.msra.mxu0 0.0
    %327 = vmatprep.subr.mxu0 0.0
    %328 = vmatpush1.msra.mxu0 0.0
    %329 = vmatprep.subr.mxu0 0.0
    %330 = vmatpush1.msra.mxu0 0.0
    %331 = vmatprep.subr.mxu0 0.0
    %332 = vmatpush1.msra.mxu0 0.0
    %333 = vmatprep.subr.mxu0 0.0
    %334 = vmatpush1.msra.mxu0 0.0
    %335 = vmatprep.subr.mxu0 0.0
    %336 = vmatpush1.msra.mxu0 0.0
    %337 = vmatprep.subr.mxu0 0.0
    %338 = vmatpush1.msra.mxu0 0.0
    %339 = vmatprep.subr.mxu0 0.0
    %340 = vmatpush1.msra.mxu0 0.0
    %341 = vmatprep.subr.mxu0 0.0
    %342 = vmatpush1.msra.mxu0 0.0
    %343 = vmatprep.subr.mxu0 0.0
    %344 = vmatpush1.msra.mxu0 0.0
    %345 = vmatprep.subr.mxu0 0.0
    %346 = vmatpush1.msra.mxu0 0.0
    %347 = vmatprep.subr.mxu0 0.0
    %348 = vmatpush1.msra.mxu0 0.0
    %349 = vmatprep.subr.mxu0 0.0
    %350 = vmatpush1.msra.mxu0 0.0
    %351 = vmatprep.subr.mxu0 0.0
    %352 = vmatpush1.msra.mxu0 0.0
    %353 = vmatprep.subr.mxu0 0.0
    %354 = vmatpush1.msra.mxu0 0.0
    %355 = vmatprep.subr.mxu0 0.0
    %356 = vmatpush1.msra.mxu0 0.0
    %357 = vmatprep.subr.mxu0 0.0
    %358 = vmatpush1.msra.mxu0 0.0
    %359 = vmatprep.subr.mxu0 0.0
    %360 = vmatpush1.msra.mxu0 0.0
    %361 = vmatprep.subr.mxu0 0.0
    %362 = vmatpush1.msra.mxu0 0.0
    %363 = vmatprep.subr.mxu0 0.0
    %364 = vmatpush1.msra.mxu0 0.0
    %365 = vmatprep.subr.mxu0 0.0
    %366 = vmatpush1.msra.mxu0 0.0
    %367 = vmatprep.subr.mxu0 0.0
    %368 = vmatpush1.msra.mxu0 0.0
    %369 = vmatprep.subr.mxu0 0.0
    %370 = vmatpush1.msra.mxu0 0.0
    %371 = vmatprep.subr.mxu0 0.0
    %372 = vmatpush1.msra.mxu0 0.0
    %373 = vmatprep.subr.mxu0 0.0
    %374 = vmatpush1.msra.mxu0 0.0
    %375 = vmatprep.mubr.f32.mxu0 0.0
    %376 = vmatmul.mubr.f32.gmra.mrb[0].mxu0 %v300
    %v377 = vpop.f32.mrb[0].mxu0
    %v378 = vadd.f32 %v281, %v377
    %v379 = vpop.f32.mrb[0].mxu0
    %v380 = vadd.f32 %v281, %v379
    %381 = vmatprep.mubr.f32.mxu0 0.0
    %382 = vmatmul.mubr.f32.gmra.mrb[0].mxu0 %v303
    %v383 = vpop.f32.mrb[0].mxu0
    %v384 = vadd.f32 %v286, %v383
    %v385 = vpop.f32.mrb[0].mxu0
    %v386 = vadd.f32 %v286, %v385
    %387 = vmatprep.mubr.f32.mxu0 0.0
    %388 = vmatmul.mubr.f32.gmra.mrb[0].mxu0 %v306
    %v389 = vpop.f32.mrb[0].mxu0
    %v390 = vadd.f32 %v291, %v389
    %v391 = vpop.f32.mrb[0].mxu0
    %v392 = vadd.f32 %v291, %v391
    %393 = vmatprep.mubr.f32.mxu0 0.0
    %394 = vmatmul.mubr.f32.gmra.mrb[0].mxu0 %v309
    %v395 = vpop.f32.mrb[0].mxu0
    %v396 = vadd.f32 %v296, %v395
    %v397 = vpop.f32.mrb[0].mxu0
    %v398 = vadd.f32 %v296, %v397
    %399 = vdwg.mxu0
    %400 = vmatprep.subr.mxu0 0.0
    %401 = vmatpush1.msra.mxu0 %v260
    %402 = vmatprep.subr.mxu0 0.0
    %403 = vmatpush1.msra.mxu0 %v263
    %404 = vmatprep.subr.mxu0 0.0
    %405 = vmatpush1.msra.mxu0 %v266
    %406 = vmatprep.subr.mxu0 0.0
    %407 = vmatpush1.msra.mxu0 %v269
    %408 = vmatprep.subr.mxu0 0.0
    %409 = vmatpush1.msra.mxu0 0.0
    %410 = vmatprep.subr.mxu0 0.0
    %411 = vmatpush1.msra.mxu0 0.0
    %412 = vmatprep.subr.mxu0 0.0
    %413 = vmatpush1.msra.mxu0 0.0
    %414 = vmatprep.subr.mxu0 0.0
    %415 = vmatpush1.msra.mxu0 0.0
    %416 = vmatprep.subr.mxu0 0.0
    %417 = vmatpush1.msra.mxu0 0.0
    %418 = vmatprep.subr.mxu0 0.0
    %419 = vmatpush1.msra.mxu0 0.0
    %420 = vmatprep.subr.mxu0 0.0
    %421 = vmatpush1.msra.mxu0 0.0
    %422 = vmatprep.subr.mxu0 0.0
    %423 = vmatpush1.msra.mxu0 0.0
    %424 = vmatprep.subr.mxu0 0.0
    %425 = vmatpush1.msra.mxu0 0.0
    %426 = vmatprep.subr.mxu0 0.0
    %427 = vmatpush1.msra.mxu0 0.0
    %428 = vmatprep.subr.mxu0 0.0
    %429 = vmatpush1.msra.mxu0 0.0
    %430 = vmatprep.subr.mxu0 0.0
    %431 = vmatpush1.msra.mxu0 0.0
    %432 = vmatprep.subr.mxu0 0.0
    %433 = vmatpush1.msra.mxu0 0.0
    %434 = vmatprep.subr.mxu0 0.0
    %435 = vmatpush1.msra.mxu0 0.0
    %436 = vmatprep.subr.mxu0 0.0
    %437 = vmatpush1.msra.mxu0 0.0
    %438 = vmatprep.subr.mxu0 0.0
    %439 = vmatpush1.msra.mxu0 0.0
    %440 = vmatprep.subr.mxu0 0.0
    %441 = vmatpush1.msra.mxu0 0.0
    %442 = vmatprep.subr.mxu0 0.0
    %443 = vmatpush1.msra.mxu0 0.0
    %444 = vmatprep.subr.mxu0 0.0
    %445 = vmatpush1.msra.mxu0 0.0
    %446 = vmatprep.subr.mxu0 0.0
    %447 = vmatpush1.msra.mxu0 0.0
    %448 = vmatprep.subr.mxu0 0.0
    %449 = vmatpush1.msra.mxu0 0.0
    %450 = vmatprep.subr.mxu0 0.0
    %451 = vmatpush1.msra.mxu0 0.0
    %452 = vmatprep.subr.mxu0 0.0
    %453 = vmatpush1.msra.mxu0 0.0
    %454 = vmatprep.subr.mxu0 0.0
    %455 = vmatpush1.msra.mxu0 0.0
    %456 = vmatprep.subr.mxu0 0.0
    %457 = vmatpush1.msra.mxu0 0.0
    %458 = vmatprep.subr.mxu0 0.0
    %459 = vmatpush1.msra.mxu0 0.0
    %460 = vmatprep.subr.mxu0 0.0
    %461 = vmatpush1.msra.mxu0 0.0
    %462 = vmatprep.subr.mxu0 0.0
    %463 = vmatpush1.msra.mxu0 0.0
    %464 = vmatprep.mubr.f32.mxu0 0.0
    %465 = vmatmul.mubr.f32.gmra.mrb[0].mxu0 %v300
    %v466 = vpop.f32.mrb[0].mxu0
    %v467 = vadd.f32 %v281, %v466
    %v468 = vpop.f32.mrb[0].mxu0
    %469 = vmatprep.mubr.f32.mxu0 0.0
    %470 = vmatmul.mubr.f32.gmra.mrb[0].mxu0 %v303
    %v471 = vpop.f32.mrb[0].mxu0
    %v472 = vadd.f32 %v286, %v471
    %v473 = vpop.f32.mrb[0].mxu0
    %474 = vmatprep.mubr.f32.mxu0 0.0
    %475 = vmatmul.mubr.f32.gmra.mrb[0].mxu0 %v306
    %v476 = vpop.f32.mrb[0].mxu0
    %v477 = vadd.f32 %v291, %v476
    %v478 = vpop.f32.mrb[0].mxu0
    %479 = vmatprep.mubr.f32.mxu0 0.0
    %480 = vmatmul.mubr.f32.gmra.mrb[0].mxu0 %v309
    %v481 = vpop.f32.mrb[0].mxu0
    %v482 = vadd.f32 %v296, %v481
    %v483 = vpop.f32.mrb[0].mxu0
    %484 = vdwg.mxu0
    %v485 = vtanh.pop %v378
    %v486 = vtanh.pop %v380
    %v487 = vtanh.pop %v467
    %v488 = vtanh.pop %v384
    %v489 = vtanh.pop %v386
    %v490 = vtanh.pop %v472
    %v491 = vtanh.pop %v390
    %v492 = vtanh.pop %v392
    %v493 = vtanh.pop %v477
    %v494 = vtanh.pop %v396
    %v495 = vtanh.pop %v398
    %v496 = vtanh.pop %v482
    %v497 = vld [vmem:[%s2 + $0x20] sm:$0xff]
    %v498 = vld [vmem:[%s2 + $0x28] sm:$0xff]
    %v499 = vld [vmem:[%s2 + $0x30] sm:$0xff]
    %v500 = vld [vmem:[%s2 + $0x38] sm:$0xff]
    %v501 = vld [vmem:[%s3 + $0x40] sm:$0xff]
    %v502 = vld [vmem:[%s3 + $0x48] sm:$0xff]
    %v503 = vld [vmem:[%s3 + $0x50] sm:$0xff]
    %v504 = vld [vmem:[%s3 + $0x58] sm:$0xff]
    %506 = vset.pattern.permute.xlu0 0
    %507 = vperm.xlu0 %506, %v501
    %v508 = vpop.permute.xlu0 %507
    %511 = vset.pattern.permute.xlu0 0
    %512 = vperm.xlu0 %511, %v502
    %v513 = vpop.permute.xlu0 %512
    %516 = vset.pattern.permute.xlu0 0
    %517 = vperm.xlu0 %516, %v503
    %v518 = vpop.permute.xlu0 %517
    %521 = vset.pattern.permute.xlu0 0
    %522 = vperm.xlu0 %521, %v504
    %v523 = vpop.permute.xlu0 %522
    %v526 = vsel %vm298, %v497, 0
    %v529 = vsel %vm298, %v498, 0
    %v532 = vsel %vm298, %v499, 0
    %v535 = vsel %vm298, %v500, 0
    %537 = vmatprep.subr.mxu0 %v486
    %538 = vmatpush1.msra.mxu0 %v485
    %539 = vmatprep.subr.mxu0 %v489
    %540 = vmatpush1.msra.mxu0 %v488
    %541 = vmatprep.subr.mxu0 %v492
    %542 = vmatpush1.msra.mxu0 %v491
    %543 = vmatprep.subr.mxu0 %v495
    %544 = vmatpush1.msra.mxu0 %v494
    %545 = vmatprep.subr.mxu0 0.0
    %546 = vmatpush1.msra.mxu0 0.0
    %547 = vmatprep.subr.mxu0 0.0
    %548 = vmatpush1.msra.mxu0 0.0
    %549 = vmatprep.subr.mxu0 0.0
    %550 = vmatpush1.msra.mxu0 0.0
    %551 = vmatprep.subr.mxu0 0.0
    %552 = vmatpush1.msra.mxu0 0.0
    %553 = vmatprep.subr.mxu0 0.0
    %554 = vmatpush1.msra.mxu0 0.0
    %555 = vmatprep.subr.mxu0 0.0
    %556 = vmatpush1.msra.mxu0 0.0
    %557 = vmatprep.subr.mxu0 0.0
    %558 = vmatpush1.msra.mxu0 0.0
    %559 = vmatprep.subr.mxu0 0.0
    %560 = vmatpush1.msra.mxu0 0.0
    %561 = vmatprep.subr.mxu0 0.0
    %562 = vmatpush1.msra.mxu0 0.0
    %563 = vmatprep.subr.mxu0 0.0
    %564 = vmatpush1.msra.mxu0 0.0
    %565 = vmatprep.subr.mxu0 0.0
    %566 = vmatpush1.msra.mxu0 0.0
    %567 = vmatprep.subr.mxu0 0.0
    %568 = vmatpush1.msra.mxu0 0.0
    %569 = vmatprep.subr.mxu0 0.0
    %570 = vmatpush1.msra.mxu0 0.0
    %571 = vmatprep.subr.mxu0 0.0
    %572 = vmatpush1.msra.mxu0 0.0
    %573 = vmatprep.subr.mxu0 0.0
    %574 = vmatpush1.msra.mxu0 0.0
    %575 = vmatprep.subr.mxu0 0.0
    %576 = vmatpush1.msra.mxu0 0.0
    %577 = vmatprep.subr.mxu0 0.0
    %578 = vmatpush1.msra.mxu0 0.0
    %579 = vmatprep.subr.mxu0 0.0
    %580 = vmatpush1.msra.mxu0 0.0
    %581 = vmatprep.subr.mxu0 0.0
    %582 = vmatpush1.msra.mxu0 0.0
    %583 = vmatprep.subr.mxu0 0.0
    %584 = vmatpush1.msra.mxu0 0.0
    %585 = vmatprep.subr.mxu0 0.0
    %586 = vmatpush1.msra.mxu0 0.0
    %587 = vmatprep.subr.mxu0 0.0
    %588 = vmatpush1.msra.mxu0 0.0
    %589 = vmatprep.subr.mxu0 0.0
    %590 = vmatpush1.msra.mxu0 0.0
    %591 = vmatprep.subr.mxu0 0.0
    %592 = vmatpush1.msra.mxu0 0.0
    %593 = vmatprep.subr.mxu0 0.0
    %594 = vmatpush1.msra.mxu0 0.0
    %595 = vmatprep.subr.mxu0 0.0
    %596 = vmatpush1.msra.mxu0 0.0
    %597 = vmatprep.subr.mxu0 0.0
    %598 = vmatpush1.msra.mxu0 0.0
    %599 = vmatprep.subr.mxu0 0.0
    %600 = vmatpush1.msra.mxu0 0.0
    %601 = vmatprep.mubr.f32.mxu0 0.0
    %602 = vmatmul.mubr.f32.gmra.mrb[0].mxu0 %v526
    %v603 = vpop.f32.mrb[0].mxu0
    %v604 = vadd.f32 %v508, %v603
    %v605 = vpop.f32.mrb[0].mxu0
    %v606 = vadd.f32 %v508, %v605
    %607 = vmatprep.mubr.f32.mxu0 0.0
    %608 = vmatmul.mubr.f32.gmra.mrb[0].mxu0 %v529
    %v609 = vpop.f32.mrb[0].mxu0
    %v610 = vadd.f32 %v513, %v609
    %v611 = vpop.f32.mrb[0].mxu0
    %v612 = vadd.f32 %v513, %v611
    %613 = vmatprep.mubr.f32.mxu0 0.0
    %614 = vmatmul.mubr.f32.gmra.mrb[0].mxu0 %v532
    %v615 = vpop.f32.mrb[0].mxu0
    %v616 = vadd.f32 %v518, %v615
    %v617 = vpop.f32.mrb[0].mxu0
    %v618 = vadd.f32 %v518, %v617
    %619 = vmatprep.mubr.f32.mxu0 0.0
    %620 = vmatmul.mubr.f32.gmra.mrb[0].mxu0 %v535
    %v621 = vpop.f32.mrb[0].mxu0
    %v622 = vadd.f32 %v523, %v621
    %v623 = vpop.f32.mrb[0].mxu0
    %v624 = vadd.f32 %v523, %v623
    %625 = vdwg.mxu0
    %626 = vmatprep.subr.mxu0 0.0
    %627 = vmatpush1.msra.mxu0 %v487
    %628 = vmatprep.subr.mxu0 0.0
    %629 = vmatpush1.msra.mxu0 %v490
    %630 = vmatprep.subr.mxu0 0.0
    %631 = vmatpush1.msra.mxu0 %v493
    %632 = vmatprep.subr.mxu0 0.0
    %633 = vmatpush1.msra.mxu0 %v496
    %634 = vmatprep.subr.mxu0 0.0
    %635 = vmatpush1.msra.mxu0 0.0
    %636 = vmatprep.subr.mxu0 0.0
    %637 = vmatpush1.msra.mxu0 0.0
    %638 = vmatprep.subr.mxu0 0.0
    %639 = vmatpush1.msra.mxu0 0.0
    %640 = vmatprep.subr.mxu0 0.0
    %641 = vmatpush1.msra.mxu0 0.0
    %642 = vmatprep.subr.mxu0 0.0
    %643 = vmatpush1.msra.mxu0 0.0
    %644 = vmatprep.subr.mxu0 0.0
    %645 = vmatpush1.msra.mxu0 0.0
    %646 = vmatprep.subr.mxu0 0.0
    %647 = vmatpush1.msra.mxu0 0.0
    %648 = vmatprep.subr.mxu0 0.0
    %649 = vmatpush1.msra.mxu0 0.0
    %650 = vmatprep.subr.mxu0 0.0
    %651 = vmatpush1.msra.mxu0 0.0
    %652 = vmatprep.subr.mxu0 0.0
    %653 = vmatpush1.msra.mxu0 0.0
    %654 = vmatprep.subr.mxu0 0.0
    %655 = vmatpush1.msra.mxu0 0.0
    %656 = vmatprep.subr.mxu0 0.0
    %657 = vmatpush1.msra.mxu0 0.0
    %658 = vmatprep.subr.mxu0 0.0
    %659 = vmatpush1.msra.mxu0 0.0
    %660 = vmatprep.subr.mxu0 0.0
    %661 = vmatpush1.msra.mxu0 0.0
    %662 = vmatprep.subr.mxu0 0.0
    %663 = vmatpush1.msra.mxu0 0.0
    %664 = vmatprep.subr.mxu0 0.0
    %665 = vmatpush1.msra.mxu0 0.0
    %666 = vmatprep.subr.mxu0 0.0
    %667 = vmatpush1.msra.mxu0 0.0
    %668 = vmatprep.subr.mxu0 0.0
    %669 = vmatpush1.msra.mxu0 0.0
    %670 = vmatprep.subr.mxu0 0.0
    %671 = vmatpush1.msra.mxu0 0.0
    %672 = vmatprep.subr.mxu0 0.0
    %673 = vmatpush1.msra.mxu0 0.0
    %674 = vmatprep.subr.mxu0 0.0
    %675 = vmatpush1.msra.mxu0 0.0
    %676 = vmatprep.subr.mxu0 0.0
    %677 = vmatpush1.msra.mxu0 0.0
    %678 = vmatprep.subr.mxu0 0.0
    %679 = vmatpush1.msra.mxu0 0.0
    %680 = vmatprep.subr.mxu0 0.0
    %681 = vmatpush1.msra.mxu0 0.0
    %682 = vmatprep.subr.mxu0 0.0
    %683 = vmatpush1.msra.mxu0 0.0
    %684 = vmatprep.subr.mxu0 0.0
    %685 = vmatpush1.msra.mxu0 0.0
    %686 = vmatprep.subr.mxu0 0.0
    %687 = vmatpush1.msra.mxu0 0.0
    %688 = vmatprep.subr.mxu0 0.0
    %689 = vmatpush1.msra.mxu0 0.0
    %690 = vmatprep.mubr.f32.mxu0 0.0
    %691 = vmatmul.mubr.f32.gmra.mrb[0].mxu0 %v526
    %v692 = vpop.f32.mrb[0].mxu0
    %v693 = vadd.f32 %v508, %v692
    %v694 = vpop.f32.mrb[0].mxu0
    %695 = vmatprep.mubr.f32.mxu0 0.0
    %696 = vmatmul.mubr.f32.gmra.mrb[0].mxu0 %v529
    %v697 = vpop.f32.mrb[0].mxu0
    %v698 = vadd.f32 %v513, %v697
    %v699 = vpop.f32.mrb[0].mxu0
    %700 = vmatprep.mubr.f32.mxu0 0.0
    %701 = vmatmul.mubr.f32.gmra.mrb[0].mxu0 %v532
    %v702 = vpop.f32.mrb[0].mxu0
    %v703 = vadd.f32 %v518, %v702
    %v704 = vpop.f32.mrb[0].mxu0
    %705 = vmatprep.mubr.f32.mxu0 0.0
    %706 = vmatmul.mubr.f32.gmra.mrb[0].mxu0 %v535
    %v707 = vpop.f32.mrb[0].mxu0
    %v708 = vadd.f32 %v523, %v707
    %v709 = vpop.f32.mrb[0].mxu0
    %710 = vdwg.mxu0
    %v711 = vtanh.pop %v604
    %v712 = vtanh.pop %v606
    %v713 = vtanh.pop %v693
    %v714 = vtanh.pop %v610
    %v715 = vtanh.pop %v612
    %v716 = vtanh.pop %v698
    %v717 = vtanh.pop %v616
    %v718 = vtanh.pop %v618
    %v719 = vtanh.pop %v703
    %v720 = vtanh.pop %v622
    %v721 = vtanh.pop %v624
    %v722 = vtanh.pop %v708
    %v723 = vld [vmem:[%s2 + $0x40] sm:$0x1]
    %v724 = vld [vmem:[%s3 + $0x60] sm:$0x1]
    %726 = vset.pattern.permute.xlu0 0
    %727 = vperm.xlu0 %726, %v724
    %v728 = vpop.permute.xlu0 %727
    %v731 = vsel %vm298, %v723, 0
    %733 = vmatprep.subr.mxu0 %v712
    %734 = vmatpush1.msra.mxu0 %v711
    %735 = vmatprep.subr.mxu0 %v715
    %736 = vmatpush1.msra.mxu0 %v714
    %737 = vmatprep.subr.mxu0 %v718
    %738 = vmatpush1.msra.mxu0 %v717
    %739 = vmatprep.subr.mxu0 %v721
    %740 = vmatpush1.msra.mxu0 %v720
    %741 = vmatprep.subr.mxu0 0.0
    %742 = vmatpush1.msra.mxu0 0.0
    %743 = vmatprep.subr.mxu0 0.0
    %744 = vmatpush1.msra.mxu0 0.0
    %745 = vmatprep.subr.mxu0 0.0
    %746 = vmatpush1.msra.mxu0 0.0
    %747 = vmatprep.subr.mxu0 0.0
    %748 = vmatpush1.msra.mxu0 0.0
    %749 = vmatprep.subr.mxu0 0.0
    %750 = vmatpush1.msra.mxu0 0.0
    %751 = vmatprep.subr.mxu0 0.0
    %752 = vmatpush1.msra.mxu0 0.0
    %753 = vmatprep.subr.mxu0 0.0
    %754 = vmatpush1.msra.mxu0 0.0
    %755 = vmatprep.subr.mxu0 0.0
    %756 = vmatpush1.msra.mxu0 0.0
    %757 = vmatprep.subr.mxu0 0.0
    %758 = vmatpush1.msra.mxu0 0.0
    %759 = vmatprep.subr.mxu0 0.0
    %760 = vmatpush1.msra.mxu0 0.0
    %761 = vmatprep.subr.mxu0 0.0
    %762 = vmatpush1.msra.mxu0 0.0
    %763 = vmatprep.subr.mxu0 0.0
    %764 = vmatpush1.msra.mxu0 0.0
    %765 = vmatprep.subr.mxu0 0.0
    %766 = vmatpush1.msra.mxu0 0.0
    %767 = vmatprep.subr.mxu0 0.0
    %768 = vmatpush1.msra.mxu0 0.0
    %769 = vmatprep.subr.mxu0 0.0
    %770 = vmatpush1.msra.mxu0 0.0
    %771 = vmatprep.subr.mxu0 0.0
    %772 = vmatpush1.msra.mxu0 0.0
    %773 = vmatprep.subr.mxu0 0.0
    %774 = vmatpush1.msra.mxu0 0.0
    %775 = vmatprep.subr.mxu0 0.0
    %776 = vmatpush1.msra.mxu0 0.0
    %777 = vmatprep.subr.mxu0 0.0
    %778 = vmatpush1.msra.mxu0 0.0
    %779 = vmatprep.subr.mxu0 0.0
    %780 = vmatpush1.msra.mxu0 0.0
    %781 = vmatprep.subr.mxu0 0.0
    %782 = vmatpush1.msra.mxu0 0.0
    %783 = vmatprep.subr.mxu0 0.0
    %784 = vmatpush1.msra.mxu0 0.0
    %785 = vmatprep.subr.mxu0 0.0
    %786 = vmatpush1.msra.mxu0 0.0
    %787 = vmatprep.subr.mxu0 0.0
    %788 = vmatpush1.msra.mxu0 0.0
    %789 = vmatprep.subr.mxu0 0.0
    %790 = vmatpush1.msra.mxu0 0.0
    %791 = vmatprep.subr.mxu0 0.0
    %792 = vmatpush1.msra.mxu0 0.0
    %793 = vmatprep.subr.mxu0 0.0
    %794 = vmatpush1.msra.mxu0 0.0
    %795 = vmatprep.subr.mxu0 0.0
    %796 = vmatpush1.msra.mxu0 0.0
    %797 = vmatprep.mubr.f32.mxu0 0.0
    %798 = vmatmul.mubr.f32.gmra.mrb[0].mxu0 %v731
    %v799 = vpop.f32.mrb[0].mxu0
    %v800 = vadd.f32 %v728, %v799
    %v801 = vpop.f32.mrb[0].mxu0
    %v802 = vadd.f32 %v728, %v801
    %803 = vdwg.mxu0
    %804 = vmatprep.subr.mxu0 0.0
    %805 = vmatpush1.msra.mxu0 %v713
    %806 = vmatprep.subr.mxu0 0.0
    %807 = vmatpush1.msra.mxu0 %v716
    %808 = vmatprep.subr.mxu0 0.0
    %809 = vmatpush1.msra.mxu0 %v719
    %810 = vmatprep.subr.mxu0 0.0
    %811 = vmatpush1.msra.mxu0 %v722
    %812 = vmatprep.subr.mxu0 0.0
    %813 = vmatpush1.msra.mxu0 0.0
    %814 = vmatprep.subr.mxu0 0.0
    %815 = vmatpush1.msra.mxu0 0.0
    %816 = vmatprep.subr.mxu0 0.0
    %817 = vmatpush1.msra.mxu0 0.0
    %818 = vmatprep.subr.mxu0 0.0
    %819 = vmatpush1.msra.mxu0 0.0
    %820 = vmatprep.subr.mxu0 0.0
    %821 = vmatpush1.msra.mxu0 0.0
    %822 = vmatprep.subr.mxu0 0.0
    %823 = vmatpush1.msra.mxu0 0.0
    %824 = vmatprep.subr.mxu0 0.0
    %825 = vmatpush1.msra.mxu0 0.0
    %826 = vmatprep.subr.mxu0 0.0
    %827 = vmatpush1.msra.mxu0 0.0
    %828 = vmatprep.subr.mxu0 0.0
    %829 = vmatpush1.msra.mxu0 0.0
    %830 = vmatprep.subr.mxu0 0.0
    %831 = vmatpush1.msra.mxu0 0.0
    %832 = vmatprep.subr.mxu0 0.0
    %833 = vmatpush1.msra.mxu0 0.0
    %834 = vmatprep.subr.mxu0 0.0
    %835 = vmatpush1.msra.mxu0 0.0
    %836 = vmatprep.subr.mxu0 0.0
    %837 = vmatpush1.msra.mxu0 0.0
    %838 = vmatprep.subr.mxu0 0.0
    %839 = vmatpush1.msra.mxu0 0.0
    %840 = vmatprep.subr.mxu0 0.0
    %841 = vmatpush1.msra.mxu0 0.0
    %842 = vmatprep.subr.mxu0 0.0
    %843 = vmatpush1.msra.mxu0 0.0
    %844 = vmatprep.subr.mxu0 0.0
    %845 = vmatpush1.msra.mxu0 0.0
    %846 = vmatprep.subr.mxu0 0.0
    %847 = vmatpush1.msra.mxu0 0.0
    %848 = vmatprep.subr.mxu0 0.0
    %849 = vmatpush1.msra.mxu0 0.0
    %850 = vmatprep.subr.mxu0 0.0
    %851 = vmatpush1.msra.mxu0 0.0
    %852 = vmatprep.subr.mxu0 0.0
    %853 = vmatpush1.msra.mxu0 0.0
    %854 = vmatprep.subr.mxu0 0.0
    %855 = vmatpush1.msra.mxu0 0.0
    %856 = vmatprep.subr.mxu0 0.0
    %857 = vmatpush1.msra.mxu0 0.0
    %858 = vmatprep.subr.mxu0 0.0
    %859 = vmatpush1.msra.mxu0 0.0
    %860 = vmatprep.subr.mxu0 0.0
    %861 = vmatpush1.msra.mxu0 0.0
    %862 = vmatprep.subr.mxu0 0.0
    %863 = vmatpush1.msra.mxu0 0.0
    %864 = vmatprep.subr.mxu0 0.0
    %865 = vmatpush1.msra.mxu0 0.0
    %866 = vmatprep.subr.mxu0 0.0
    %867 = vmatpush1.msra.mxu0 0.0
    %868 = vmatprep.mubr.f32.mxu0 0.0
    %869 = vmatmul.mubr.f32.gmra.mrb[0].mxu0 %v731
    %v870 = vpop.f32.mrb[0].mxu0
    %v871 = vadd.f32 %v728, %v870
    %v872 = vpop.f32.mrb[0].mxu0
    %873 = vdwg.mxu0
    %v877 = vcombine.low %v800, %v802
    %v879 = vunpack.c.l.s4 1966171168
    %v880 = vunpack.c.0.s8 %v879
    %v881 = vlaneseq
    %v882 = vshrl.u32 %v881, 7
    %v883 = vsub.s32 %v880, %v882
    %v884 = vrot.slane %v877, %v883
    %v886 = vunpack.c.l.s4 1966171168
    %v887 = vunpack.c.0.s8 %v886
    %v888 = vlaneseq
    %v889 = vshrl.u32 %v888, 7
    %v890 = vsub.s32 %v887, %v889
    %v891 = vrot.slane %v871, %v890
    %v892 = vcombine.low %v884, %v891
    %v894 = vunpack.c.l.s4 1966171168
    %v895 = vunpack.c.0.s8 %v894
    %v896 = vlaneseq
    %v897 = vshrl.u32 %v896, 7
    %v898 = vsub.s32 %v895, %v897
    %v899 = vrot.slane %v892, %v898
    %v901 = vlaneseq
    %vm902 = vcmp.ge.s32.totalorder %v901, 0
    %vm903 = vcmp.lt.s32.totalorder %v901, 384
    %vm904 = vmand %vm902, %vm903
    %905 = vst.msk [vmem:[#allocation2] sm:$0x7] %vm904, %v899
    // Predicated region
    $region18: #{tpu_custom_call.1} parent=1 // pred_check
      _
    $region19: #{tpu_custom_call.1} parent=1 // pred_check_branch
      %907 = sbr.rel (0) target = $region21
    $region20: #{tpu_custom_call.1} parent=1 // pred_region
      %s909 = ssub.s32 48, 48
      %910 = vsyncadd [#allocation3], %s909
      %s912 = sshll.u32 [#allocation2], 4
      %s913 = int_to_ptr.vmem [resolvable:$true] %s912
      %915 = dma.vmem_to_hbm [thread:$0]  %s913, 48, %s4, [#allocation3]
    $region21: #{tpu_custom_call.1} parent=1 // pred_fallthru
      _
    // Predicated region
    $region22: #{tpu_custom_call.1} parent=1 // pred_check
      _
    $region23: #{tpu_custom_call.1} parent=1 // pred_check_branch
      %917 = sbr.rel (0) target = $region25
    $region24: #{tpu_custom_call.1} parent=1 // pred_region
      %918 = dma.done [#allocation3], 48
    $region25: #{tpu_custom_call.1} parent=1 // pred_fallthru
      _
    %919 = vsyncpa [#allocation3], 1

// kernel: tpu_custom_call.1
$region0: #{tpu_custom_call.1}
  #allocation0 [shape = 'u32[]', space=smem, size = 0x4, offset = 0x4, fixed_abs, tag = 'smem constant byte address 0x4 - core index']
  #allocation1 [shape = 'u32[144,128]{1,0:T(1,128)}', space=vmem, size = 0x12000, scoped, tag = 'internal scratch']
  %s0 = inlined_call_operand.vmem [shape: f32[2,384], index: 0, kind: input, shape index: {}]
  %s1 = inlined_call_operand.vmem [shape: f32[32,2], index: 1, kind: input, shape index: {}]
  %s2 = inlined_call_operand.vmem [shape: f32[80,32], index: 2, kind: input, shape index: {}]
  %s3 = inlined_call_operand.vmem [shape: f32[104,1], index: 3, kind: input, shape index: {}]
  %s4 = inlined_call_operand.hbm [shape: f32[1,384], index: 4, kind: output, shape index: {}]
  %s5 = sld [smem:[#allocation0]]
  $region26: #{tpu_custom_call.1} parent=0
    _
  %s7 = ssub.s32 1, %s5
  %s8 = scalar_select 0, %s7, %s5
  $region1: #{tpu_custom_call.1} parent=0
    #allocation2 [shape = 'u8[1536]{0}', space=vmem, size = 0x800, scoped, tag = 'output window, operand 0, single buffered']
    #allocation3 [shape = 's32[1]{0}', space=sflag, size = 0x4, scoped, tag = 'scoped memory for tpu_custom_call.1']
    %9 = vsyncpa [#allocation3], 0
    // Predicated region
    $region2: #{tpu_custom_call.1} parent=1 // pred_check
      _
    $region3: #{tpu_custom_call.1} parent=1 // pred_check_branch
      %11 = sbr.rel (0) target = $region5
    $region4: #{tpu_custom_call.1} parent=1 // pred_region
      _
    $region5: #{tpu_custom_call.1} parent=1 // pred_fallthru
      _
    // Predicated region
    $region6: #{tpu_custom_call.1} parent=1 // pred_check
      _
    $region7: #{tpu_custom_call.1} parent=1 // pred_check_branch
      %13 = sbr.rel (0) target = $region9
    $region8: #{tpu_custom_call.1} parent=1 // pred_region
      _
    $region9: #{tpu_custom_call.1} parent=1 // pred_fallthru
      _
    // Predicated region
    $region10: #{tpu_custom_call.1} parent=1 // pred_check
      _
    $region11: #{tpu_custom_call.1} parent=1 // pred_check_branch
      %15 = sbr.rel (0) target = $region13
    $region12: #{tpu_custom_call.1} parent=1 // pred_region
      _
    $region13: #{tpu_custom_call.1} parent=1 // pred_fallthru
      _
    // Predicated region
    $region14: #{tpu_custom_call.1} parent=1 // pred_check
      _
    $region15: #{tpu_custom_call.1} parent=1 // pred_check_branch
      %17 = sbr.rel (0) target = $region17
    $region16: #{tpu_custom_call.1} parent=1 // pred_region
      _
    $region17: #{tpu_custom_call.1} parent=1 // pred_fallthru
      _
    %v18 = vld [vmem:[%s0] sm:$0x3f]
    %v19 = vld [vmem:[%s1] sm:$0xff]
    %v20 = vld [vmem:[%s1 + $0x8] sm:$0xff]
    %v21 = vld [vmem:[%s1 + $0x10] sm:$0xff]
    %v22 = vld [vmem:[%s1 + $0x18] sm:$0xff]
    %v23 = vld [vmem:[%s3] sm:$0xff]
    %v24 = vld [vmem:[%s3 + $0x8] sm:$0xff]
    %v25 = vld [vmem:[%s3 + $0x10] sm:$0xff]
    %v26 = vld [vmem:[%s3 + $0x18] sm:$0xff]
    %28 = vset.pattern.permute.xlu0 0
    %29 = vperm.xlu0 %28, %v23
    %v30 = vpop.permute.xlu0 %29
    %33 = vset.pattern.permute.xlu0 0
    %34 = vperm.xlu0 %33, %v24
    %v35 = vpop.permute.xlu0 %34
    %38 = vset.pattern.permute.xlu0 0
    %39 = vperm.xlu0 %38, %v25
    %v40 = vpop.permute.xlu0 %39
    %43 = vset.pattern.permute.xlu0 0
    %44 = vperm.xlu0 %43, %v26
    %v45 = vpop.permute.xlu0 %44
    %v48 = vcombine.high %v18, %v18
    %v50 = vunpack.c.l.s4 1983009808
    %v51 = vunpack.c.0.s8 %v50
    %v52 = vlaneseq
    %v53 = vshrl.u32 %v52, 7
    %v54 = vsub.s32 %v51, %v53
    %v55 = vrot.slane %v18, %v54
    %v57 = vunpack.c.l.s4 1983009808
    %v58 = vunpack.c.0.s8 %v57
    %v59 = vlaneseq
    %v60 = vshrl.u32 %v59, 7
    %v61 = vsub.s32 %v58, %v60
    %v62 = vrot.slane %v48, %v61
    %v63 = vcombine.high %v55, %v55
    %vm64 = vcmask 15360
    %v66 = vsel %vm64, %v19, 0
    %v69 = vsel %vm64, %v20, 0
    %v72 = vsel %vm64, %v21, 0
    %v75 = vsel %vm64, %v22, 0
    %vm77 = vcmask 1041408
    %v78 = vsel %vm77, %v55, 0
    %v80 = vsel %vm77, %v63, 0
    %v82 = vsel %vm77, %v62, 0
    %84 = vmatprep.subr.mxu0 %v80
    %85 = vmatpush1.msra.mxu0 %v78
    %86 = vmatprep.subr.mxu0 0.0
    %87 = vmatpush1.msra.mxu0 0.0
    %88 = vmatprep.subr.mxu0 0.0
    %89 = vmatpush1.msra.mxu0 0.0
    %90 = vmatprep.subr.mxu0 0.0
    %91 = vmatpush1.msra.mxu0 0.0
    %92 = vmatprep.subr.mxu0 0.0
    %93 = vmatpush1.msra.mxu0 0.0
    %94 = vmatprep.subr.mxu0 0.0
    %95 = vmatpush1.msra.mxu0 0.0
    %96 = vmatprep.subr.mxu0 0.0
    %97 = vmatpush1.msra.mxu0 0.0
    %98 = vmatprep.subr.mxu0 0.0
    %99 = vmatpush1.msra.mxu0 0.0
    %100 = vmatprep.subr.mxu0 0.0
    %101 = vmatpush1.msra.mxu0 0.0
    %102 = vmatprep.subr.mxu0 0.0
    %103 = vmatpush1.msra.mxu0 0.0
    %104 = vmatprep.subr.mxu0 0.0
    %105 = vmatpush1.msra.mxu0 0.0
    %106 = vmatprep.subr.mxu0 0.0
    %107 = vmatpush1.msra.mxu0 0.0
    %108 = vmatprep.subr.mxu0 0.0
    %109 = vmatpush1.msra.mxu0 0.0
    %110 = vmatprep.subr.mxu0 0.0
    %111 = vmatpush1.msra.mxu0 0.0
    %112 = vmatprep.subr.mxu0 0.0
    %113 = vmatpush1.msra.mxu0 0.0
    %114 = vmatprep.subr.mxu0 0.0
    %115 = vmatpush1.msra.mxu0 0.0
    %116 = vmatprep.subr.mxu0 0.0
    %117 = vmatpush1.msra.mxu0 0.0
    %118 = vmatprep.subr.mxu0 0.0
    %119 = vmatpush1.msra.mxu0 0.0
    %120 = vmatprep.subr.mxu0 0.0
    %121 = vmatpush1.msra.mxu0 0.0
    %122 = vmatprep.subr.mxu0 0.0
    %123 = vmatpush1.msra.mxu0 0.0
    %124 = vmatprep.subr.mxu0 0.0
    %125 = vmatpush1.msra.mxu0 0.0
    %126 = vmatprep.subr.mxu0 0.0
    %127 = vmatpush1.msra.mxu0 0.0
    %128 = vmatprep.subr.mxu0 0.0
    %129 = vmatpush1.msra.mxu0 0.0
    %130 = vmatprep.subr.mxu0 0.0
    %131 = vmatpush1.msra.mxu0 0.0
    %132 = vmatprep.subr.mxu0 0.0
    %133 = vmatpush1.msra.mxu0 0.0
    %134 = vmatprep.subr.mxu0 0.0
    %135 = vmatpush1.msra.mxu0 0.0
    %136 = vmatprep.subr.mxu0 0.0
    %137 = vmatpush1.msra.mxu0 0.0
    %138 = vmatprep.subr.mxu0 0.0
    %139 = vmatpush1.msra.mxu0 0.0
    %140 = vmatprep.subr.mxu0 0.0
    %141 = vmatpush1.msra.mxu0 0.0
    %142 = vmatprep.subr.mxu0 0.0
    %143 = vmatpush1.msra.mxu0 0.0
    %144 = vmatprep.subr.mxu0 0.0
    %145 = vmatpush1.msra.mxu0 0.0
    %146 = vmatprep.subr.mxu0 0.0
    %147 = vmatpush1.msra.mxu0 0.0
    %148 = vmatprep.mubr.f32.mxu0 0.0
    %149 = vmatmul.mubr.f32.gmra.mrb[0].mxu0 %v66
    %v150 = vpop.f32.mrb[0].mxu0
    %v151 = vadd.f32 %v30, %v150
    %v152 = vpop.f32.mrb[0].mxu0
    %v153 = vadd.f32 %v30, %v152
    %154 = vmatprep.mubr.f32.mxu0 0.0
    %155 = vmatmul.mubr.f32.gmra.mrb[0].mxu0 %v69
    %v156 = vpop.f32.mrb[0].mxu0
    %v157 = vadd.f32 %v35, %v156
    %v158 = vpop.f32.mrb[0].mxu0
    %v159 = vadd.f32 %v35, %v158
    %160 = vmatprep.mubr.f32.mxu0 0.0
    %161 = vmatmul.mubr.f32.gmra.mrb[0].mxu0 %v72
    %v162 = vpop.f32.mrb[0].mxu0
    %v163 = vadd.f32 %v40, %v162
    %v164 = vpop.f32.mrb[0].mxu0
    %v165 = vadd.f32 %v40, %v164
    %166 = vmatprep.mubr.f32.mxu0 0.0
    %167 = vmatmul.mubr.f32.gmra.mrb[0].mxu0 %v75
    %v168 = vpop.f32.mrb[0].mxu0
    %v169 = vadd.f32 %v45, %v168
    %v170 = vpop.f32.mrb[0].mxu0
    %v171 = vadd.f32 %v45, %v170
    %172 = vdwg.mxu0
    %173 = vmatprep.subr.mxu0 0.0
    %174 = vmatpush1.msra.mxu0 %v82
    %175 = vmatprep.subr.mxu0 0.0
    %176 = vmatpush1.msra.mxu0 0.0
    %177 = vmatprep.subr.mxu0 0.0
    %178 = vmatpush1.msra.mxu0 0.0
    %179 = vmatprep.subr.mxu0 0.0
    %180 = vmatpush1.msra.mxu0 0.0
    %181 = vmatprep.subr.mxu0 0.0
    %182 = vmatpush1.msra.mxu0 0.0
    %183 = vmatprep.subr.mxu0 0.0
    %184 = vmatpush1.msra.mxu0 0.0
    %185 = vmatprep.subr.mxu0 0.0
    %186 = vmatpush1.msra.mxu0 0.0
    %187 = vmatprep.subr.mxu0 0.0
    %188 = vmatpush1.msra.mxu0 0.0
    %189 = vmatprep.subr.mxu0 0.0
    %190 = vmatpush1.msra.mxu0 0.0
    %191 = vmatprep.subr.mxu0 0.0
    %192 = vmatpush1.msra.mxu0 0.0
    %193 = vmatprep.subr.mxu0 0.0
    %194 = vmatpush1.msra.mxu0 0.0
    %195 = vmatprep.subr.mxu0 0.0
    %196 = vmatpush1.msra.mxu0 0.0
    %197 = vmatprep.subr.mxu0 0.0
    %198 = vmatpush1.msra.mxu0 0.0
    %199 = vmatprep.subr.mxu0 0.0
    %200 = vmatpush1.msra.mxu0 0.0
    %201 = vmatprep.subr.mxu0 0.0
    %202 = vmatpush1.msra.mxu0 0.0
    %203 = vmatprep.subr.mxu0 0.0
    %204 = vmatpush1.msra.mxu0 0.0
    %205 = vmatprep.subr.mxu0 0.0
    %206 = vmatpush1.msra.mxu0 0.0
    %207 = vmatprep.subr.mxu0 0.0
    %208 = vmatpush1.msra.mxu0 0.0
    %209 = vmatprep.subr.mxu0 0.0
    %210 = vmatpush1.msra.mxu0 0.0
    %211 = vmatprep.subr.mxu0 0.0
    %212 = vmatpush1.msra.mxu0 0.0
    %213 = vmatprep.subr.mxu0 0.0
    %214 = vmatpush1.msra.mxu0 0.0
    %215 = vmatprep.subr.mxu0 0.0
    %216 = vmatpush1.msra.mxu0 0.0
    %217 = vmatprep.subr.mxu0 0.0
    %218 = vmatpush1.msra.mxu0 0.0
    %219 = vmatprep.subr.mxu0 0.0
    %220 = vmatpush1.msra.mxu0 0.0
    %221 = vmatprep.subr.mxu0 0.0
    %222 = vmatpush1.msra.mxu0 0.0
    %223 = vmatprep.subr.mxu0 0.0
    %224 = vmatpush1.msra.mxu0 0.0
    %225 = vmatprep.subr.mxu0 0.0
    %226 = vmatpush1.msra.mxu0 0.0
    %227 = vmatprep.subr.mxu0 0.0
    %228 = vmatpush1.msra.mxu0 0.0
    %229 = vmatprep.subr.mxu0 0.0
    %230 = vmatpush1.msra.mxu0 0.0
    %231 = vmatprep.subr.mxu0 0.0
    %232 = vmatpush1.msra.mxu0 0.0
    %233 = vmatprep.subr.mxu0 0.0
    %234 = vmatpush1.msra.mxu0 0.0
    %235 = vmatprep.subr.mxu0 0.0
    %236 = vmatpush1.msra.mxu0 0.0
    %237 = vmatprep.mubr.f32.mxu0 0.0
    %238 = vmatmul.mubr.f32.gmra.mrb[0].mxu0 %v66
    %v239 = vpop.f32.mrb[0].mxu0
    %v240 = vadd.f32 %v30, %v239
    %v241 = vpop.f32.mrb[0].mxu0
    %242 = vmatprep.mubr.f32.mxu0 0.0
    %243 = vmatmul.mubr.f32.gmra.mrb[0].mxu0 %v69
    %v244 = vpop.f32.mrb[0].mxu0
    %v245 = vadd.f32 %v35, %v244
    %v246 = vpop.f32.mrb[0].mxu0
    %247 = vmatprep.mubr.f32.mxu0 0.0
    %248 = vmatmul.mubr.f32.gmra.mrb[0].mxu0 %v72
    %v249 = vpop.f32.mrb[0].mxu0
    %v250 = vadd.f32 %v40, %v249
    %v251 = vpop.f32.mrb[0].mxu0
    %252 = vmatprep.mubr.f32.mxu0 0.0
    %253 = vmatmul.mubr.f32.gmra.mrb[0].mxu0 %v75
    %v254 = vpop.f32.mrb[0].mxu0
    %v255 = vadd.f32 %v45, %v254
    %v256 = vpop.f32.mrb[0].mxu0
    %257 = vdwg.mxu0
    %v258 = vtanh.pop %v151
    %v259 = vtanh.pop %v153
    %v260 = vtanh.pop %v240
    %v261 = vtanh.pop %v157
    %v262 = vtanh.pop %v159
    %v263 = vtanh.pop %v245
    %v264 = vtanh.pop %v163
    %v265 = vtanh.pop %v165
    %v266 = vtanh.pop %v250
    %v267 = vtanh.pop %v169
    %v268 = vtanh.pop %v171
    %v269 = vtanh.pop %v255
    %v270 = vld [vmem:[%s2] sm:$0xff]
    %v271 = vld [vmem:[%s2 + $0x8] sm:$0xff]
    %v272 = vld [vmem:[%s2 + $0x10] sm:$0xff]
    %v273 = vld [vmem:[%s2 + $0x18] sm:$0xff]
    %v274 = vld [vmem:[%s3 + $0x20] sm:$0xff]
    %v275 = vld [vmem:[%s3 + $0x28] sm:$0xff]
    %v276 = vld [vmem:[%s3 + $0x30] sm:$0xff]
    %v277 = vld [vmem:[%s3 + $0x38] sm:$0xff]
    %279 = vset.pattern.permute.xlu0 0
    %280 = vperm.xlu0 %279, %v274
    %v281 = vpop.permute.xlu0 %280
    %284 = vset.pattern.permute.xlu0 0
    %285 = vperm.xlu0 %284, %v275
    %v286 = vpop.permute.xlu0 %285
    %289 = vset.pattern.permute.xlu0 0
    %290 = vperm.xlu0 %289, %v276
    %v291 = vpop.permute.xlu0 %290
    %294 = vset.pattern.permute.xlu0 0
    %295 = vperm.xlu0 %294, %v277
    %v296 = vpop.permute.xlu0 %295
    %vm298 = vcmask 261120
    %v300 = vsel %vm298, %v270, 0
    %v303 = vsel %vm298, %v271, 0
    %v306 = vsel %vm298, %v272, 0
    %v309 = vsel %vm298, %v273, 0
    %311 = vmatprep.subr.mxu0 %v259
    %312 = vmatpush1.msra.mxu0 %v258
    %313 = vmatprep.subr.mxu0 %v262
    %314 = vmatpush1.msra.mxu0 %v261
    %315 = vmatprep.subr.mxu0 %v265
    %316 = vmatpush1.msra.mxu0 %v264
    %317 = vmatprep.subr.mxu0 %v268
    %318 = vmatpush1.msra.mxu0 %v267
    %319 = vmatprep.subr.mxu0 0.0
    %320 = vmatpush1.msra.mxu0 0.0
    %321 = vmatprep.subr.mxu0 0.0
    %322 = vmatpush1.msra.mxu0 0.0
    %323 = vmatprep.subr.mxu0 0.0
    %324 = vmatpush1.msra.mxu0 0.0
    %325 = vmatprep.subr.mxu0 0.0
    %326 = vmatpush1.msra.mxu0 0.0
    %327 = vmatprep.subr.mxu0 0.0
    %328 = vmatpush1.msra.mxu0 0.0
    %329 = vmatprep.subr.mxu0 0.0
    %330 = vmatpush1.msra.mxu0 0.0
    %331 = vmatprep.subr.mxu0 0.0
    %332 = vmatpush1.msra.mxu0 0.0
    %333 = vmatprep.subr.mxu0 0.0
    %334 = vmatpush1.msra.mxu0 0.0
    %335 = vmatprep.subr.mxu0 0.0
    %336 = vmatpush1.msra.mxu0 0.0
    %337 = vmatprep.subr.mxu0 0.0
    %338 = vmatpush1.msra.mxu0 0.0
    %339 = vmatprep.subr.mxu0 0.0
    %340 = vmatpush1.msra.mxu0 0.0
    %341 = vmatprep.subr.mxu0 0.0
    %342 = vmatpush1.msra.mxu0 0.0
    %343 = vmatprep.subr.mxu0 0.0
    %344 = vmatpush1.msra.mxu0 0.0
    %345 = vmatprep.subr.mxu0 0.0
    %346 = vmatpush1.msra.mxu0 0.0
    %347 = vmatprep.subr.mxu0 0.0
    %348 = vmatpush1.msra.mxu0 0.0
    %349 = vmatprep.subr.mxu0 0.0
    %350 = vmatpush1.msra.mxu0 0.0
    %351 = vmatprep.subr.mxu0 0.0
    %352 = vmatpush1.msra.mxu0 0.0
    %353 = vmatprep.subr.mxu0 0.0
    %354 = vmatpush1.msra.mxu0 0.0
    %355 = vmatprep.subr.mxu0 0.0
    %356 = vmatpush1.msra.mxu0 0.0
    %357 = vmatprep.subr.mxu0 0.0
    %358 = vmatpush1.msra.mxu0 0.0
    %359 = vmatprep.subr.mxu0 0.0
    %360 = vmatpush1.msra.mxu0 0.0
    %361 = vmatprep.subr.mxu0 0.0
    %362 = vmatpush1.msra.mxu0 0.0
    %363 = vmatprep.subr.mxu0 0.0
    %364 = vmatpush1.msra.mxu0 0.0
    %365 = vmatprep.subr.mxu0 0.0
    %366 = vmatpush1.msra.mxu0 0.0
    %367 = vmatprep.subr.mxu0 0.0
    %368 = vmatpush1.msra.mxu0 0.0
    %369 = vmatprep.subr.mxu0 0.0
    %370 = vmatpush1.msra.mxu0 0.0
    %371 = vmatprep.subr.mxu0 0.0
    %372 = vmatpush1.msra.mxu0 0.0
    %373 = vmatprep.subr.mxu0 0.0
    %374 = vmatpush1.msra.mxu0 0.0
    %375 = vmatprep.mubr.f32.mxu0 0.0
    %376 = vmatmul.mubr.f32.gmra.mrb[0].mxu0 %v300
    %v377 = vpop.f32.mrb[0].mxu0
    %v378 = vadd.f32 %v281, %v377
    %v379 = vpop.f32.mrb[0].mxu0
    %v380 = vadd.f32 %v281, %v379
    %381 = vmatprep.mubr.f32.mxu0 0.0
    %382 = vmatmul.mubr.f32.gmra.mrb[0].mxu0 %v303
    %v383 = vpop.f32.mrb[0].mxu0
    %v384 = vadd.f32 %v286, %v383
    %v385 = vpop.f32.mrb[0].mxu0
    %v386 = vadd.f32 %v286, %v385
    %387 = vmatprep.mubr.f32.mxu0 0.0
    %388 = vmatmul.mubr.f32.gmra.mrb[0].mxu0 %v306
    %v389 = vpop.f32.mrb[0].mxu0
    %v390 = vadd.f32 %v291, %v389
    %v391 = vpop.f32.mrb[0].mxu0
    %v392 = vadd.f32 %v291, %v391
    %393 = vmatprep.mubr.f32.mxu0 0.0
    %394 = vmatmul.mubr.f32.gmra.mrb[0].mxu0 %v309
    %v395 = vpop.f32.mrb[0].mxu0
    %v396 = vadd.f32 %v296, %v395
    %v397 = vpop.f32.mrb[0].mxu0
    %v398 = vadd.f32 %v296, %v397
    %399 = vdwg.mxu0
    %400 = vmatprep.subr.mxu0 0.0
    %401 = vmatpush1.msra.mxu0 %v260
    %402 = vmatprep.subr.mxu0 0.0
    %403 = vmatpush1.msra.mxu0 %v263
    %404 = vmatprep.subr.mxu0 0.0
    %405 = vmatpush1.msra.mxu0 %v266
    %406 = vmatprep.subr.mxu0 0.0
    %407 = vmatpush1.msra.mxu0 %v269
    %408 = vmatprep.subr.mxu0 0.0
    %409 = vmatpush1.msra.mxu0 0.0
    %410 = vmatprep.subr.mxu0 0.0
    %411 = vmatpush1.msra.mxu0 0.0
    %412 = vmatprep.subr.mxu0 0.0
    %413 = vmatpush1.msra.mxu0 0.0
    %414 = vmatprep.subr.mxu0 0.0
    %415 = vmatpush1.msra.mxu0 0.0
    %416 = vmatprep.subr.mxu0 0.0
    %417 = vmatpush1.msra.mxu0 0.0
    %418 = vmatprep.subr.mxu0 0.0
    %419 = vmatpush1.msra.mxu0 0.0
    %420 = vmatprep.subr.mxu0 0.0
    %421 = vmatpush1.msra.mxu0 0.0
    %422 = vmatprep.subr.mxu0 0.0
    %423 = vmatpush1.msra.mxu0 0.0
    %424 = vmatprep.subr.mxu0 0.0
    %425 = vmatpush1.msra.mxu0 0.0
    %426 = vmatprep.subr.mxu0 0.0
    %427 = vmatpush1.msra.mxu0 0.0
    %428 = vmatprep.subr.mxu0 0.0
    %429 = vmatpush1.msra.mxu0 0.0
    %430 = vmatprep.subr.mxu0 0.0
    %431 = vmatpush1.msra.mxu0 0.0
    %432 = vmatprep.subr.mxu0 0.0
    %433 = vmatpush1.msra.mxu0 0.0
    %434 = vmatprep.subr.mxu0 0.0
    %435 = vmatpush1.msra.mxu0 0.0
    %436 = vmatprep.subr.mxu0 0.0
    %437 = vmatpush1.msra.mxu0 0.0
    %438 = vmatprep.subr.mxu0 0.0
    %439 = vmatpush1.msra.mxu0 0.0
    %440 = vmatprep.subr.mxu0 0.0
    %441 = vmatpush1.msra.mxu0 0.0
    %442 = vmatprep.subr.mxu0 0.0
    %443 = vmatpush1.msra.mxu0 0.0
    %444 = vmatprep.subr.mxu0 0.0
    %445 = vmatpush1.msra.mxu0 0.0
    %446 = vmatprep.subr.mxu0 0.0
    %447 = vmatpush1.msra.mxu0 0.0
    %448 = vmatprep.subr.mxu0 0.0
    %449 = vmatpush1.msra.mxu0 0.0
    %450 = vmatprep.subr.mxu0 0.0
    %451 = vmatpush1.msra.mxu0 0.0
    %452 = vmatprep.subr.mxu0 0.0
    %453 = vmatpush1.msra.mxu0 0.0
    %454 = vmatprep.subr.mxu0 0.0
    %455 = vmatpush1.msra.mxu0 0.0
    %456 = vmatprep.subr.mxu0 0.0
    %457 = vmatpush1.msra.mxu0 0.0
    %458 = vmatprep.subr.mxu0 0.0
    %459 = vmatpush1.msra.mxu0 0.0
    %460 = vmatprep.subr.mxu0 0.0
    %461 = vmatpush1.msra.mxu0 0.0
    %462 = vmatprep.subr.mxu0 0.0
    %463 = vmatpush1.msra.mxu0 0.0
    %464 = vmatprep.mubr.f32.mxu0 0.0
    %465 = vmatmul.mubr.f32.gmra.mrb[0].mxu0 %v300
    %v466 = vpop.f32.mrb[0].mxu0
    %v467 = vadd.f32 %v281, %v466
    %v468 = vpop.f32.mrb[0].mxu0
    %469 = vmatprep.mubr.f32.mxu0 0.0
    %470 = vmatmul.mubr.f32.gmra.mrb[0].mxu0 %v303
    %v471 = vpop.f32.mrb[0].mxu0
    %v472 = vadd.f32 %v286, %v471
    %v473 = vpop.f32.mrb[0].mxu0
    %474 = vmatprep.mubr.f32.mxu0 0.0
    %475 = vmatmul.mubr.f32.gmra.mrb[0].mxu0 %v306
    %v476 = vpop.f32.mrb[0].mxu0
    %v477 = vadd.f32 %v291, %v476
    %v478 = vpop.f32.mrb[0].mxu0
    %479 = vmatprep.mubr.f32.mxu0 0.0
    %480 = vmatmul.mubr.f32.gmra.mrb[0].mxu0 %v309
    %v481 = vpop.f32.mrb[0].mxu0
    %v482 = vadd.f32 %v296, %v481
    %v483 = vpop.f32.mrb[0].mxu0
    %484 = vdwg.mxu0
    %v485 = vtanh.pop %v378
    %v486 = vtanh.pop %v380
    %v487 = vtanh.pop %v467
    %v488 = vtanh.pop %v384
    %v489 = vtanh.pop %v386
    %v490 = vtanh.pop %v472
    %v491 = vtanh.pop %v390
    %v492 = vtanh.pop %v392
    %v493 = vtanh.pop %v477
    %v494 = vtanh.pop %v396
    %v495 = vtanh.pop %v398
    %v496 = vtanh.pop %v482
    %v497 = vld [vmem:[%s2 + $0x20] sm:$0xff]
    %v498 = vld [vmem:[%s2 + $0x28] sm:$0xff]
    %v499 = vld [vmem:[%s2 + $0x30] sm:$0xff]
    %v500 = vld [vmem:[%s2 + $0x38] sm:$0xff]
    %v501 = vld [vmem:[%s3 + $0x40] sm:$0xff]
    %v502 = vld [vmem:[%s3 + $0x48] sm:$0xff]
    %v503 = vld [vmem:[%s3 + $0x50] sm:$0xff]
    %v504 = vld [vmem:[%s3 + $0x58] sm:$0xff]
    %506 = vset.pattern.permute.xlu0 0
    %507 = vperm.xlu0 %506, %v501
    %v508 = vpop.permute.xlu0 %507
    %511 = vset.pattern.permute.xlu0 0
    %512 = vperm.xlu0 %511, %v502
    %v513 = vpop.permute.xlu0 %512
    %516 = vset.pattern.permute.xlu0 0
    %517 = vperm.xlu0 %516, %v503
    %v518 = vpop.permute.xlu0 %517
    %521 = vset.pattern.permute.xlu0 0
    %522 = vperm.xlu0 %521, %v504
    %v523 = vpop.permute.xlu0 %522
    %v526 = vsel %vm298, %v497, 0
    %v529 = vsel %vm298, %v498, 0
    %v532 = vsel %vm298, %v499, 0
    %v535 = vsel %vm298, %v500, 0
    %537 = vmatprep.subr.mxu0 %v486
    %538 = vmatpush1.msra.mxu0 %v485
    %539 = vmatprep.subr.mxu0 %v489
    %540 = vmatpush1.msra.mxu0 %v488
    %541 = vmatprep.subr.mxu0 %v492
    %542 = vmatpush1.msra.mxu0 %v491
    %543 = vmatprep.subr.mxu0 %v495
    %544 = vmatpush1.msra.mxu0 %v494
    %545 = vmatprep.subr.mxu0 0.0
    %546 = vmatpush1.msra.mxu0 0.0
    %547 = vmatprep.subr.mxu0 0.0
    %548 = vmatpush1.msra.mxu0 0.0
    %549 = vmatprep.subr.mxu0 0.0
    %550 = vmatpush1.msra.mxu0 0.0
    %551 = vmatprep.subr.mxu0 0.0
    %552 = vmatpush1.msra.mxu0 0.0
    %553 = vmatprep.subr.mxu0 0.0
    %554 = vmatpush1.msra.mxu0 0.0
    %555 = vmatprep.subr.mxu0 0.0
    %556 = vmatpush1.msra.mxu0 0.0
    %557 = vmatprep.subr.mxu0 0.0
    %558 = vmatpush1.msra.mxu0 0.0
    %559 = vmatprep.subr.mxu0 0.0
    %560 = vmatpush1.msra.mxu0 0.0
    %561 = vmatprep.subr.mxu0 0.0
    %562 = vmatpush1.msra.mxu0 0.0
    %563 = vmatprep.subr.mxu0 0.0
    %564 = vmatpush1.msra.mxu0 0.0
    %565 = vmatprep.subr.mxu0 0.0
    %566 = vmatpush1.msra.mxu0 0.0
    %567 = vmatprep.subr.mxu0 0.0
    %568 = vmatpush1.msra.mxu0 0.0
    %569 = vmatprep.subr.mxu0 0.0
    %570 = vmatpush1.msra.mxu0 0.0
    %571 = vmatprep.subr.mxu0 0.0
    %572 = vmatpush1.msra.mxu0 0.0
    %573 = vmatprep.subr.mxu0 0.0
    %574 = vmatpush1.msra.mxu0 0.0
    %575 = vmatprep.subr.mxu0 0.0
    %576 = vmatpush1.msra.mxu0 0.0
    %577 = vmatprep.subr.mxu0 0.0
    %578 = vmatpush1.msra.mxu0 0.0
    %579 = vmatprep.subr.mxu0 0.0
    %580 = vmatpush1.msra.mxu0 0.0
    %581 = vmatprep.subr.mxu0 0.0
    %582 = vmatpush1.msra.mxu0 0.0
    %583 = vmatprep.subr.mxu0 0.0
    %584 = vmatpush1.msra.mxu0 0.0
    %585 = vmatprep.subr.mxu0 0.0
    %586 = vmatpush1.msra.mxu0 0.0
    %587 = vmatprep.subr.mxu0 0.0
    %588 = vmatpush1.msra.mxu0 0.0
    %589 = vmatprep.subr.mxu0 0.0
    %590 = vmatpush1.msra.mxu0 0.0
    %591 = vmatprep.subr.mxu0 0.0
    %592 = vmatpush1.msra.mxu0 0.0
    %593 = vmatprep.subr.mxu0 0.0
    %594 = vmatpush1.msra.mxu0 0.0
    %595 = vmatprep.subr.mxu0 0.0
    %596 = vmatpush1.msra.mxu0 0.0
    %597 = vmatprep.subr.mxu0 0.0
    %598 = vmatpush1.msra.mxu0 0.0
    %599 = vmatprep.subr.mxu0 0.0
    %600 = vmatpush1.msra.mxu0 0.0
    %601 = vmatprep.mubr.f32.mxu0 0.0
    %602 = vmatmul.mubr.f32.gmra.mrb[0].mxu0 %v526
    %v603 = vpop.f32.mrb[0].mxu0
    %v604 = vadd.f32 %v508, %v603
    %v605 = vpop.f32.mrb[0].mxu0
    %v606 = vadd.f32 %v508, %v605
    %607 = vmatprep.mubr.f32.mxu0 0.0
    %608 = vmatmul.mubr.f32.gmra.mrb[0].mxu0 %v529
    %v609 = vpop.f32.mrb[0].mxu0
    %v610 = vadd.f32 %v513, %v609
    %v611 = vpop.f32.mrb[0].mxu0
    %v612 = vadd.f32 %v513, %v611
    %613 = vmatprep.mubr.f32.mxu0 0.0
    %614 = vmatmul.mubr.f32.gmra.mrb[0].mxu0 %v532
    %v615 = vpop.f32.mrb[0].mxu0
    %v616 = vadd.f32 %v518, %v615
    %v617 = vpop.f32.mrb[0].mxu0
    %v618 = vadd.f32 %v518, %v617
    %619 = vmatprep.mubr.f32.mxu0 0.0
    %620 = vmatmul.mubr.f32.gmra.mrb[0].mxu0 %v535
    %v621 = vpop.f32.mrb[0].mxu0
    %v622 = vadd.f32 %v523, %v621
    %v623 = vpop.f32.mrb[0].mxu0
    %v624 = vadd.f32 %v523, %v623
    %625 = vdwg.mxu0
    %626 = vmatprep.subr.mxu0 0.0
    %627 = vmatpush1.msra.mxu0 %v487
    %628 = vmatprep.subr.mxu0 0.0
    %629 = vmatpush1.msra.mxu0 %v490
    %630 = vmatprep.subr.mxu0 0.0
    %631 = vmatpush1.msra.mxu0 %v493
    %632 = vmatprep.subr.mxu0 0.0
    %633 = vmatpush1.msra.mxu0 %v496
    %634 = vmatprep.subr.mxu0 0.0
    %635 = vmatpush1.msra.mxu0 0.0
    %636 = vmatprep.subr.mxu0 0.0
    %637 = vmatpush1.msra.mxu0 0.0
    %638 = vmatprep.subr.mxu0 0.0
    %639 = vmatpush1.msra.mxu0 0.0
    %640 = vmatprep.subr.mxu0 0.0
    %641 = vmatpush1.msra.mxu0 0.0
    %642 = vmatprep.subr.mxu0 0.0
    %643 = vmatpush1.msra.mxu0 0.0
    %644 = vmatprep.subr.mxu0 0.0
    %645 = vmatpush1.msra.mxu0 0.0
    %646 = vmatprep.subr.mxu0 0.0
    %647 = vmatpush1.msra.mxu0 0.0
    %648 = vmatprep.subr.mxu0 0.0
    %649 = vmatpush1.msra.mxu0 0.0
    %650 = vmatprep.subr.mxu0 0.0
    %651 = vmatpush1.msra.mxu0 0.0
    %652 = vmatprep.subr.mxu0 0.0
    %653 = vmatpush1.msra.mxu0 0.0
    %654 = vmatprep.subr.mxu0 0.0
    %655 = vmatpush1.msra.mxu0 0.0
    %656 = vmatprep.subr.mxu0 0.0
    %657 = vmatpush1.msra.mxu0 0.0
    %658 = vmatprep.subr.mxu0 0.0
    %659 = vmatpush1.msra.mxu0 0.0
    %660 = vmatprep.subr.mxu0 0.0
    %661 = vmatpush1.msra.mxu0 0.0
    %662 = vmatprep.subr.mxu0 0.0
    %663 = vmatpush1.msra.mxu0 0.0
    %664 = vmatprep.subr.mxu0 0.0
    %665 = vmatpush1.msra.mxu0 0.0
    %666 = vmatprep.subr.mxu0 0.0
    %667 = vmatpush1.msra.mxu0 0.0
    %668 = vmatprep.subr.mxu0 0.0
    %669 = vmatpush1.msra.mxu0 0.0
    %670 = vmatprep.subr.mxu0 0.0
    %671 = vmatpush1.msra.mxu0 0.0
    %672 = vmatprep.subr.mxu0 0.0
    %673 = vmatpush1.msra.mxu0 0.0
    %674 = vmatprep.subr.mxu0 0.0
    %675 = vmatpush1.msra.mxu0 0.0
    %676 = vmatprep.subr.mxu0 0.0
    %677 = vmatpush1.msra.mxu0 0.0
    %678 = vmatprep.subr.mxu0 0.0
    %679 = vmatpush1.msra.mxu0 0.0
    %680 = vmatprep.subr.mxu0 0.0
    %681 = vmatpush1.msra.mxu0 0.0
    %682 = vmatprep.subr.mxu0 0.0
    %683 = vmatpush1.msra.mxu0 0.0
    %684 = vmatprep.subr.mxu0 0.0
    %685 = vmatpush1.msra.mxu0 0.0
    %686 = vmatprep.subr.mxu0 0.0
    %687 = vmatpush1.msra.mxu0 0.0
    %688 = vmatprep.subr.mxu0 0.0
    %689 = vmatpush1.msra.mxu0 0.0
    %690 = vmatprep.mubr.f32.mxu0 0.0
    %691 = vmatmul.mubr.f32.gmra.mrb[0].mxu0 %v526
    %v692 = vpop.f32.mrb[0].mxu0
    %v693 = vadd.f32 %v508, %v692
    %v694 = vpop.f32.mrb[0].mxu0
    %695 = vmatprep.mubr.f32.mxu0 0.0
    %696 = vmatmul.mubr.f32.gmra.mrb[0].mxu0 %v529
    %v697 = vpop.f32.mrb[0].mxu0
    %v698 = vadd.f32 %v513, %v697
    %v699 = vpop.f32.mrb[0].mxu0
    %700 = vmatprep.mubr.f32.mxu0 0.0
    %701 = vmatmul.mubr.f32.gmra.mrb[0].mxu0 %v532
    %v702 = vpop.f32.mrb[0].mxu0
    %v703 = vadd.f32 %v518, %v702
    %v704 = vpop.f32.mrb[0].mxu0
    %705 = vmatprep.mubr.f32.mxu0 0.0
    %706 = vmatmul.mubr.f32.gmra.mrb[0].mxu0 %v535
    %v707 = vpop.f32.mrb[0].mxu0
    %v708 = vadd.f32 %v523, %v707
    %v709 = vpop.f32.mrb[0].mxu0
    %710 = vdwg.mxu0
    %v711 = vtanh.pop %v604
    %v712 = vtanh.pop %v606
    %v713 = vtanh.pop %v693
    %v714 = vtanh.pop %v610
    %v715 = vtanh.pop %v612
    %v716 = vtanh.pop %v698
    %v717 = vtanh.pop %v616
    %v718 = vtanh.pop %v618
    %v719 = vtanh.pop %v703
    %v720 = vtanh.pop %v622
    %v721 = vtanh.pop %v624
    %v722 = vtanh.pop %v708
    %v723 = vld [vmem:[%s2 + $0x40] sm:$0x1]
    %v724 = vld [vmem:[%s3 + $0x60] sm:$0x1]
    %726 = vset.pattern.permute.xlu0 0
    %727 = vperm.xlu0 %726, %v724
    %v728 = vpop.permute.xlu0 %727
    %v731 = vsel %vm298, %v723, 0
    %733 = vmatprep.subr.mxu0 %v712
    %734 = vmatpush1.msra.mxu0 %v711
    %735 = vmatprep.subr.mxu0 %v715
    %736 = vmatpush1.msra.mxu0 %v714
    %737 = vmatprep.subr.mxu0 %v718
    %738 = vmatpush1.msra.mxu0 %v717
    %739 = vmatprep.subr.mxu0 %v721
    %740 = vmatpush1.msra.mxu0 %v720
    %741 = vmatprep.subr.mxu0 0.0
    %742 = vmatpush1.msra.mxu0 0.0
    %743 = vmatprep.subr.mxu0 0.0
    %744 = vmatpush1.msra.mxu0 0.0
    %745 = vmatprep.subr.mxu0 0.0
    %746 = vmatpush1.msra.mxu0 0.0
    %747 = vmatprep.subr.mxu0 0.0
    %748 = vmatpush1.msra.mxu0 0.0
    %749 = vmatprep.subr.mxu0 0.0
    %750 = vmatpush1.msra.mxu0 0.0
    %751 = vmatprep.subr.mxu0 0.0
    %752 = vmatpush1.msra.mxu0 0.0
    %753 = vmatprep.subr.mxu0 0.0
    %754 = vmatpush1.msra.mxu0 0.0
    %755 = vmatprep.subr.mxu0 0.0
    %756 = vmatpush1.msra.mxu0 0.0
    %757 = vmatprep.subr.mxu0 0.0
    %758 = vmatpush1.msra.mxu0 0.0
    %759 = vmatprep.subr.mxu0 0.0
    %760 = vmatpush1.msra.mxu0 0.0
    %761 = vmatprep.subr.mxu0 0.0
    %762 = vmatpush1.msra.mxu0 0.0
    %763 = vmatprep.subr.mxu0 0.0
    %764 = vmatpush1.msra.mxu0 0.0
    %765 = vmatprep.subr.mxu0 0.0
    %766 = vmatpush1.msra.mxu0 0.0
    %767 = vmatprep.subr.mxu0 0.0
    %768 = vmatpush1.msra.mxu0 0.0
    %769 = vmatprep.subr.mxu0 0.0
    %770 = vmatpush1.msra.mxu0 0.0
    %771 = vmatprep.subr.mxu0 0.0
    %772 = vmatpush1.msra.mxu0 0.0
    %773 = vmatprep.subr.mxu0 0.0
    %774 = vmatpush1.msra.mxu0 0.0
    %775 = vmatprep.subr.mxu0 0.0
    %776 = vmatpush1.msra.mxu0 0.0
    %777 = vmatprep.subr.mxu0 0.0
    %778 = vmatpush1.msra.mxu0 0.0
    %779 = vmatprep.subr.mxu0 0.0
    %780 = vmatpush1.msra.mxu0 0.0
    %781 = vmatprep.subr.mxu0 0.0
    %782 = vmatpush1.msra.mxu0 0.0
    %783 = vmatprep.subr.mxu0 0.0
    %784 = vmatpush1.msra.mxu0 0.0
    %785 = vmatprep.subr.mxu0 0.0
    %786 = vmatpush1.msra.mxu0 0.0
    %787 = vmatprep.subr.mxu0 0.0
    %788 = vmatpush1.msra.mxu0 0.0
    %789 = vmatprep.subr.mxu0 0.0
    %790 = vmatpush1.msra.mxu0 0.0
    %791 = vmatprep.subr.mxu0 0.0
    %792 = vmatpush1.msra.mxu0 0.0
    %793 = vmatprep.subr.mxu0 0.0
    %794 = vmatpush1.msra.mxu0 0.0
    %795 = vmatprep.subr.mxu0 0.0
    %796 = vmatpush1.msra.mxu0 0.0
    %797 = vmatprep.mubr.f32.mxu0 0.0
    %798 = vmatmul.mubr.f32.gmra.mrb[0].mxu0 %v731
    %v799 = vpop.f32.mrb[0].mxu0
    %v800 = vadd.f32 %v728, %v799
    %v801 = vpop.f32.mrb[0].mxu0
    %v802 = vadd.f32 %v728, %v801
    %803 = vdwg.mxu0
    %804 = vmatprep.subr.mxu0 0.0
    %805 = vmatpush1.msra.mxu0 %v713
    %806 = vmatprep.subr.mxu0 0.0
    %807 = vmatpush1.msra.mxu0 %v716
    %808 = vmatprep.subr.mxu0 0.0
    %809 = vmatpush1.msra.mxu0 %v719
    %810 = vmatprep.subr.mxu0 0.0
    %811 = vmatpush1.msra.mxu0 %v722
    %812 = vmatprep.subr.mxu0 0.0
    %813 = vmatpush1.msra.mxu0 0.0
    %814 = vmatprep.subr.mxu0 0.0
    %815 = vmatpush1.msra.mxu0 0.0
    %816 = vmatprep.subr.mxu0 0.0
    %817 = vmatpush1.msra.mxu0 0.0
    %818 = vmatprep.subr.mxu0 0.0
    %819 = vmatpush1.msra.mxu0 0.0
    %820 = vmatprep.subr.mxu0 0.0
    %821 = vmatpush1.msra.mxu0 0.0
    %822 = vmatprep.subr.mxu0 0.0
    %823 = vmatpush1.msra.mxu0 0.0
    %824 = vmatprep.subr.mxu0 0.0
    %825 = vmatpush1.msra.mxu0 0.0
    %826 = vmatprep.subr.mxu0 0.0
    %827 = vmatpush1.msra.mxu0 0.0
    %828 = vmatprep.subr.mxu0 0.0
    %829 = vmatpush1.msra.mxu0 0.0
    %830 = vmatprep.subr.mxu0 0.0
    %831 = vmatpush1.msra.mxu0 0.0
    %832 = vmatprep.subr.mxu0 0.0
    %833 = vmatpush1.msra.mxu0 0.0
    %834 = vmatprep.subr.mxu0 0.0
    %835 = vmatpush1.msra.mxu0 0.0
    %836 = vmatprep.subr.mxu0 0.0
    %837 = vmatpush1.msra.mxu0 0.0
    %838 = vmatprep.subr.mxu0 0.0
    %839 = vmatpush1.msra.mxu0 0.0
    %840 = vmatprep.subr.mxu0 0.0
    %841 = vmatpush1.msra.mxu0 0.0
    %842 = vmatprep.subr.mxu0 0.0
    %843 = vmatpush1.msra.mxu0 0.0
    %844 = vmatprep.subr.mxu0 0.0
    %845 = vmatpush1.msra.mxu0 0.0
    %846 = vmatprep.subr.mxu0 0.0
    %847 = vmatpush1.msra.mxu0 0.0
    %848 = vmatprep.subr.mxu0 0.0
    %849 = vmatpush1.msra.mxu0 0.0
    %850 = vmatprep.subr.mxu0 0.0
    %851 = vmatpush1.msra.mxu0 0.0
    %852 = vmatprep.subr.mxu0 0.0
    %853 = vmatpush1.msra.mxu0 0.0
    %854 = vmatprep.subr.mxu0 0.0
    %855 = vmatpush1.msra.mxu0 0.0
    %856 = vmatprep.subr.mxu0 0.0
    %857 = vmatpush1.msra.mxu0 0.0
    %858 = vmatprep.subr.mxu0 0.0
    %859 = vmatpush1.msra.mxu0 0.0
    %860 = vmatprep.subr.mxu0 0.0
    %861 = vmatpush1.msra.mxu0 0.0
    %862 = vmatprep.subr.mxu0 0.0
    %863 = vmatpush1.msra.mxu0 0.0
    %864 = vmatprep.subr.mxu0 0.0
    %865 = vmatpush1.msra.mxu0 0.0
    %866 = vmatprep.subr.mxu0 0.0
    %867 = vmatpush1.msra.mxu0 0.0
    %868 = vmatprep.mubr.f32.mxu0 0.0
    %869 = vmatmul.mubr.f32.gmra.mrb[0].mxu0 %v731
    %v870 = vpop.f32.mrb[0].mxu0
    %v871 = vadd.f32 %v728, %v870
    %v872 = vpop.f32.mrb[0].mxu0
    %873 = vdwg.mxu0
    %v877 = vcombine.low %v800, %v802
    %v879 = vunpack.c.l.s4 1966171168
    %v880 = vunpack.c.0.s8 %v879
    %v881 = vlaneseq
    %v882 = vshrl.u32 %v881, 7
    %v883 = vsub.s32 %v880, %v882
    %v884 = vrot.slane %v877, %v883
    %v886 = vunpack.c.l.s4 1966171168
    %v887 = vunpack.c.0.s8 %v886
    %v888 = vlaneseq
    %v889 = vshrl.u32 %v888, 7
    %v890 = vsub.s32 %v887, %v889
    %v891 = vrot.slane %v871, %v890
    %v892 = vcombine.low %v884, %v891
    %v894 = vunpack.c.l.s4 1966171168
    %v895 = vunpack.c.0.s8 %v894
    %v896 = vlaneseq
    %v897 = vshrl.u32 %v896, 7
    %v898 = vsub.s32 %v895, %v897
    %v899 = vrot.slane %v892, %v898
    %v901 = vlaneseq
    %vm902 = vcmp.ge.s32.totalorder %v901, 0
    %vm903 = vcmp.lt.s32.totalorder %v901, 384
    %vm904 = vmand %vm902, %vm903
    %905 = vst.msk [vmem:[#allocation2] sm:$0x7] %vm904, %v899
    // Predicated region
    $region18: #{tpu_custom_call.1} parent=1 // pred_check
      _
    $region19: #{tpu_custom_call.1} parent=1 // pred_check_branch
      %907 = sbr.rel (0) target = $region21
    $region20: #{tpu_custom_call.1} parent=1 // pred_region
      %s909 = ssub.s32 48, 48
      %910 = vsyncadd [#allocation3], %s909
      %s912 = sshll.u32 [#allocation2], 4
      %s913 = int_to_ptr.vmem [resolvable:$true] %s912
      %915 = dma.vmem_to_hbm [thread:$0]  %s913, 48, %s4, [#allocation3]
    $region21: #{tpu_custom_call.1} parent=1 // pred_fallthru
      _
    // Predicated region
    $region22: #{tpu_custom_call.1} parent=1 // pred_check
      _
    $region23: #{tpu_custom_call.1} parent=1 // pred_check_branch
      %917 = sbr.rel (0) target = $region25
    $region24: #{tpu_custom_call.1} parent=1 // pred_region
      %918 = dma.done [#allocation3], 48
    $region25: #{tpu_custom_call.1} parent=1 // pred_fallthru
      _
    %919 = vsyncpa [#allocation3], 1

</llo_original>
